<compile_context>
chip_gen: v5e
topology: v5e:2x2
jax: 0.10.0
libtpu: 0.0.40
codegen_flags: <defaults>
</compile_context>

<pallas_src>
import math
import numpy as np
import jax
import jax.numpy as jnp
from jax.experimental import pallas as pl
from jax.experimental.pallas import tpu as pltpu

# ----------------------- module "hyper-parameters" -------------------------
CUTOFF = 2.0                 # filter cutoff length
SCALE  = 256.0               # spatial domain length
ACC    = 4                   # derivative accuracy order
DX     = CUTOFF / 2.0        # grid step (=> L = SCALE // DX = 256)
BOUNDS = (0.1, 0.3)          # Hardtanh bounds for the Smagorinsky constant
HIDDEN = 8                   # hidden channels of the Cs CNN
KC     = 5                   # kernel width of the Cs CNN convs
L      = int(SCALE // DX)    # spatial points (256, lane-aligned)
N      = 2                   # demo batch
SQRT2  = math.sqrt(2.0)

assert L % 128 == 0, "spatial dim must be lane-aligned"


def central_diff_stencil(dx, acc):
    table = {
        2: np.array([-0.5, 0.0, 0.5]),
        4: np.array([1.0 / 12.0, -2.0 / 3.0, 0.0, 2.0 / 3.0, -1.0 / 12.0]),
        6: np.array([-1.0 / 60.0, 3.0 / 20.0, -3.0 / 4.0, 0.0,
                      3.0 / 4.0, -3.0 / 20.0, 1.0 / 60.0]),
    }
    return table[acc] / dx


def box_filter_weights(cutoff, scale, tol=1e-8):
    dx = cutoff / 2.0
    xx = np.linspace(0.0, scale, int(scale // dx), endpoint=False) - scale / 2.0
    raw = (np.abs(xx) <= cutoff / 2.0 + tol).astype(np.float64)
    w = raw / raw.sum()
    nz = np.nonzero(w > tol)[0]
    w = w[nz.min():nz.max() + 1]
    if len(w) % 2 == 0:
        w = np.r_[w, 0.0]
    return w


D_TAPS = tuple(float(v) for v in central_diff_stencil(DX, ACC))      # d/dx (5 taps)
F_TAPS = tuple(float(v) for v in box_filter_weights(CUTOFF, SCALE))  # LES box filter
_delta = np.zeros(len(F_TAPS)); _delta[len(F_TAPS) // 2] = 1.0
G_TAPS = tuple(float(v) for v in (_delta - np.asarray(F_TAPS)))       # x - filter(x)
# sqrt(2) and cutoff^2 folded into the final derivative taps (compile-time).
FINAL_TAPS = tuple(SQRT2 * CUTOFF * CUTOFF * w for w in D_TAPS)

# Effective folded layer-1 stencil extent: (derivative or high-pass) o conv.
EFF_R = len(D_TAPS) // 2 + KC // 2            # half-width (=4)
EFF_T = 2 * EFF_R + 1                         # number of taps (=9)
assert len(G_TAPS) // 2 + KC // 2 <= EFF_R

# Antisymmetry assumption for the half-multiply derivative evaluation.
_cD = len(D_TAPS) // 2
assert all(abs(D_TAPS[_cD + j] + D_TAPS[_cD - j]) < 1e-12 for j in range(_cD + 1))


# ------------------------------ kernel helpers ------------------------------
def _lane_roller(u):
    """Lazy cache of circular lane-rolls of `u` (shift deduplication)."""
    Lk = u.shape[-1]
    cache = {0: u}

    def get(shift):
        s = shift % Lk                       # non-negative rotate, same semantics
        if s not in cache:
            cache[s] = pltpu.roll(u, shift=s, axis=u.ndim - 1)
        return cache[s]

    return get


def _antisym_deriv(get, taps):
    """y[i] = sum_k taps[k]*u[i+k-c] for antisymmetric centered taps:
    y = sum_{j>=1} taps[c+j] * (u[i+j] - u[i-j]);  u[i+j] == roll(u, -j)[i]."""
    c = len(taps) // 2
    acc = None
    for j in range(1, c + 1):
        w = float(taps[c + j])
        if w == 0.0:
            continue
        term = (get(-j) - get(j)) * w
        acc = term if acc is None else acc + term
    return acc


# ------------------------------- kernel ------------------------------------
def smagorinsky_kernel(x_ref, e_ref, b1_ref, w2_ref, b2_ref, o_ref):
    # x block: (NB, L) f32 -- batch rows on sublanes, spatial dim on lanes.
    x = x_ref[...]
    Lk = x.shape[-1]
    rx = _lane_roller(x)

    # Derivative of x (antisymmetric tap pairing). Needed only for the closure;
    # the Cs CNN reads the folded stencil directly from rolls of x.
    xdiff = _antisym_deriv(rx, D_TAPS)

    # ---- Cs CNN layer 1 (folded): hidden[o][i] = relu(b1[o] + sum_j E[o,j]*x[i+j-R])
    xt = [rx(EFF_R - j) for j in range(EFF_T)]      # shares the x-roll cache
    hidden = []
    for o in range(HIDDEN):
        acc = None
        for j in range(EFF_T):
            term = e_ref[o * EFF_T + j] * xt[j]     # SMEM scalar-broadcast FMA
            acc = term if acc is None else acc + term
        hidden.append(jnp.maximum(acc + b1_ref[o], 0.0))

    # ---- Cs CNN layer 2: Conv1d(H->1, KC, circular) via linearity of the shift:
    # cs = b2 + sum_k roll(sum_h W2[h,k]*hidden[h], c1-k)  (KC-1 rolls total).
    c1 = KC // 2
    cs = None
    for k in range(KC):
        g = None
        for h in range(HIDDEN):
            term = w2_ref[k * HIDDEN + h] * hidden[h]
            g = term if g is None else g + term
        sh = (c1 - k) % Lk
        gk = g if sh == 0 else pltpu.roll(g, shift=sh, axis=1)
        cs = gk if cs is None else cs + gk
    cs = jnp.clip(cs + b2_ref[0], BOUNDS[0], BOUNDS[1])   # Hardtanh(0.1, 0.3)

    # ---- Smagorinsky closure + final derivative (sqrt2*cutoff^2 in FINAL_TAPS).
    t = cs * cs * jnp.abs(xdiff) * xdiff
    rt = _lane_roller(t)
    o_ref[...] = _antisym_deriv(rt, FINAL_TAPS)


# ---------------------------- host-side folding -----------------------------
def _fold_layer1_stencil(w1):
    """Fold Conv1d(2->H,KC) weights with the derivative / (delta - box_filter)
    stencils into one (HIDDEN, EFF_T) stencil acting directly on x (exact)."""
    w = np.array(jax.device_get(w1), dtype=np.float64).reshape(HIDDEN, 2, KC)
    d = np.array(D_TAPS, dtype=np.float64)
    g = np.array(G_TAPS, dtype=np.float64)
    off_d = EFF_R - (len(D_TAPS) // 2 + KC // 2)    # 0
    off_g = EFF_R - (len(G_TAPS) // 2 + KC // 2)    # 1
    E = np.zeros((HIDDEN, EFF_T), dtype=np.float64)
    for o in range(HIDDEN):
        e0 = np.convolve(w[o, 0], d)                # taps on x from channel 0 path
        e1 = np.convolve(w[o, 1], g)                # taps on x from channel 1 path
        E[o, off_d:off_d + len(e0)] += e0
        E[o, off_g:off_g + len(e1)] += e1
    return jnp.asarray(E.reshape(-1), dtype=jnp.float32)


def _round_up(a, m):
    return (a + m - 1) // m * m


def _choose_rows(n):
    """Pick (rows_per_block, padded_rows).

    * n <= 8 : one full-array block, no padding, no per-step overhead.
    * n < 32 : single block, rows padded to a sublane multiple of 8.
    * n >= 32: big blocks (amortize the ~0.35us per-grid-step cost, cap 128)
               but at least 2 grid steps so the 'parallel' batch axis can
               shard across v7x's two TensorCores.
    """
    if n <= 8:
        return n, n
    if n < 32:
        nb = _round_up(n, 8)
        return nb, nb
    nb = min(128, _round_up((n + 1) // 2, 8))
    return nb, _round_up(n, nb)


# ------------------------------ wrapper -------------------------------------
def smagorinsky_forward(x, w1, b1, w2, b2):
    """x: (n, 1, L); w1: (HIDDEN, 2, KC); b1: (HIDDEN,); w2: (1, HIDDEN, KC); b2: (1,)."""
    n = x.shape[0]
    assert x.shape[1:] == (1, L)
    nb, n_pad = _choose_rows(n)

    # Layout plumbing on the host (free): lane-dense (n, L) slab; zero-pad rows
    # to a block multiple; weights folded + flattened into 1-D SMEM tables.
    x2 = x.reshape(n, L).astype(jnp.float32)
    if n_pad != n:
        x2 = jnp.pad(x2, ((0, n_pad - n), (0, 0)))

    e_flat  = _fold_layer1_stencil(w1)                                    # (H*EFF_T,)
    b1_flat = jnp.asarray(b1, jnp.float32).reshape(HIDDEN)                # (H,)
    w2_flat = jnp.transpose(
        jnp.asarray(w2, jnp.float32).reshape(HIDDEN, KC)).reshape(-1)     # [k*H + h]
    b2_flat = jnp.asarray(b2, jnp.float32).reshape(1)

    # Advisory cost: tiny, latency-bound kernel.
    flops_per_elem = (5 + HIDDEN * (2 * EFF_T + 1) + 2 * KC * HIDDEN + 2 + 4 + 5)
    cost = pl.CostEstimate(
        flops=int(flops_per_elem * n_pad * L),
        transcendentals=0,
        bytes_accessed=int(2 * n_pad * L * 4 +
                           4 * (e_flat.size + b1_flat.size +
                                w2_flat.size + b2_flat.size)),
    )

    out2 = pl.pallas_call(
        smagorinsky_kernel,
        out_shape=jax.ShapeDtypeStruct((n_pad, L), jnp.float32),
        grid=(n_pad // nb,),
        in_specs=[
            pl.BlockSpec((nb, L), lambda i: (i, 0)),                      # x
            pl.BlockSpec(memory_space=pltpu.MemorySpace.SMEM),            # folded W1
            pl.BlockSpec(memory_space=pltpu.MemorySpace.SMEM),            # b1
            pl.BlockSpec(memory_space=pltpu.MemorySpace.SMEM),            # W2 [k,h]
            pl.BlockSpec(memory_space=pltpu.MemorySpace.SMEM),            # b2
        ],
        out_specs=pl.BlockSpec((nb, L), lambda i: (i, 0)),
        compiler_params=pltpu.CompilerParams(
            dimension_semantics=("parallel",)),   # megacore-shardable batch axis
        cost_estimate=cost,
    )(x2, e_flat, b1_flat, w2_flat, b2_flat)
    return out2[:n].reshape(n, 1, L)


# ------------------------- pure-JAX reference (unfolded) --------------------
def _circ_conv_ref(u, taps):
    c = len(taps) // 2
    acc = jnp.zeros_like(u)
    for k, w in enumerate(taps):
        if w != 0.0:
            acc = acc + w * jnp.roll(u, c - k, axis=-1)
    return acc


def smagorinsky_reference(x, w1, b1, w2, b2):
    n = x.shape[0]
    x2 = x.reshape(n, L).astype(jnp.float32)
    xdiff = _circ_conv_ref(x2, D_TAPS)
    feat1 = x2 - _circ_conv_ref(x2, F_TAPS)
    c1 = KC // 2
    hidden = []
    for o in range(HIDDEN):
        acc = jnp.zeros_like(x2) + b1[o]
        for k in range(KC):
            acc = acc + w1[o, 0, k] * jnp.roll(xdiff, c1 - k, axis=-1)
            acc = acc + w1[o, 1, k] * jnp.roll(feat1, c1 - k, axis=-1)
        hidden.append(jnp.maximum(acc, 0.0))
    cs = jnp.zeros_like(x2) + b2[0]
    for k in range(KC):
        for h in range(HIDDEN):
            cs = cs + w2[0, h, k] * jnp.roll(hidden[h], c1 - k, axis=-1)
    cs = jnp.clip(cs, BOUNDS[0], BOUNDS[1])
    t = (cs * CUTOFF) ** 2 * jnp.abs(xdiff) * xdiff
    out = _circ_conv_ref(SQRT2 * t, D_TAPS)
    return out.reshape(n, 1, L)


if __name__ == "__main__":
    key = jax.random.PRNGKey(0)
    k1, k2, k3, k4, kx, kx2 = jax.random.split(key, 6)

    # Cs CNN parameters in natural Conv1d layout (deterministic synthetic init).
    w1 = jax.random.normal(k1, (HIDDEN, 2, KC), jnp.float32) / math.sqrt(2 * KC)
    b1 = jax.random.normal(k2, (HIDDEN,), jnp.float32) * 0.01
    w2 = jax.random.normal(k3, (1, HIDDEN, KC), jnp.float32) / math.sqrt(KC * HIDDEN)
    b2 = jax.random.normal(k4, (1,), jnp.float32) * 0.01

    # Small-batch path: single full-array block.
    x = jax.random.normal(kx, (N, 1, L), jnp.float32)
    out = jax.block_until_ready(smagorinsky_forward(x, w1, b1, w2, b2))
    assert out.shape == (N, 1, L) and out.dtype == jnp.float32
    assert bool(jnp.all(jnp.isfinite(out)))
    ref = smagorinsky_reference(x, w1, b1, w2, b2)
    err = float(jnp.max(jnp.abs(out - ref)))
    scl = max(float(jnp.max(jnp.abs(ref))), 1.0)
    assert err <= 1e-3 * scl + 1e-4, f"kernel/reference mismatch: {err}"

    # Larger batch: exercises multi-row blocks, row padding and the 2-step
    # 'parallel' grid (v7x megacore path).
    n_big = 40
    xb = jax.random.normal(kx2, (n_big, 1, L), jnp.float32)
    outb = jax.block_until_ready(smagorinsky_forward(xb, w1, b1, w2, b2))
    assert outb.shape == (n_big, 1, L)
    assert bool(jnp.all(jnp.isfinite(outb)))
    refb = smagorinsky_reference(xb, w1, b1, w2, b2)
    errb = float(jnp.max(jnp.abs(outb - refb)))
    sclb = max(float(jnp.max(jnp.abs(refb))), 1.0)
    assert errb <= 1e-3 * sclb + 1e-4, f"kernel/reference mismatch (big batch): {errb}"

    print("KERNEL_OK")
</pallas_src>

<mosaic_0001>
module attributes {stable_mosaic.version = 11 : i64} {
  func.func @smagorinsky_kernel(%arg0: i32, %arg1: memref<2x256xf32, #tpu.memory_space<vmem>>, %arg2: memref<72xf32, #tpu.memory_space<smem>>, %arg3: memref<8xf32, #tpu.memory_space<smem>>, %arg4: memref<40xf32, #tpu.memory_space<smem>>, %arg5: memref<1xf32, #tpu.memory_space<smem>>, %arg6: memref<2x256xf32, #tpu.memory_space<vmem>>) attributes {dimension_semantics = [#tpu.dimension_semantics<parallel>], iteration_bounds = array<i64: 1>, scalar_prefetch = 0 : i64, scratch_operands = 0 : i64, tpu.core_type = #tpu.core_type<tc>, window_params = [{transform_indices = @transform_0, window_bounds = array<i64: 2, 256>}, {transform_indices = @transform_1, window_bounds = array<i64: 72>}, {transform_indices = @transform_2, window_bounds = array<i64: 8>}, {transform_indices = @transform_3, window_bounds = array<i64: 40>}, {transform_indices = @transform_4, window_bounds = array<i64: 1>}, {transform_indices = @transform_5, window_bounds = array<i64: 2, 256>}]} {
    %c0 = arith.constant 0 : index
    %c0_0 = arith.constant 0 : index
    %0 = vector.load %arg1[%c0, %c0_0] : memref<2x256xf32, #tpu.memory_space<vmem>>, vector<2x256xf32>
    %c255_i32 = arith.constant 255 : i32
    %1 = tpu.dynamic_rotate %0 by %c255_i32 dim 1 : vector<2x256xf32>, i32 -> vector<2x256xf32>
    %c1_i32 = arith.constant 1 : i32
    %2 = tpu.dynamic_rotate %0 by %c1_i32 dim 1 : vector<2x256xf32>, i32 -> vector<2x256xf32>
    %3 = arith.subf %1, %2 : vector<2x256xf32>
    %cst = arith.constant 0.666666686 : f32
    %4 = vector.broadcast %cst : f32 to vector<2x256xf32>
    %5 = arith.mulf %3, %4 : vector<2x256xf32>
    %c254_i32 = arith.constant 254 : i32
    %6 = tpu.dynamic_rotate %0 by %c254_i32 dim 1 : vector<2x256xf32>, i32 -> vector<2x256xf32>
    %c2_i32 = arith.constant 2 : i32
    %7 = tpu.dynamic_rotate %0 by %c2_i32 dim 1 : vector<2x256xf32>, i32 -> vector<2x256xf32>
    %8 = arith.subf %6, %7 : vector<2x256xf32>
    %cst_1 = arith.constant -0.0833333358 : f32
    %9 = vector.broadcast %cst_1 : f32 to vector<2x256xf32>
    %10 = arith.mulf %8, %9 : vector<2x256xf32>
    %11 = arith.addf %5, %10 : vector<2x256xf32>
    %c4_i32 = arith.constant 4 : i32
    %12 = tpu.dynamic_rotate %0 by %c4_i32 dim 1 : vector<2x256xf32>, i32 -> vector<2x256xf32>
    %c3_i32 = arith.constant 3 : i32
    %13 = tpu.dynamic_rotate %0 by %c3_i32 dim 1 : vector<2x256xf32>, i32 -> vector<2x256xf32>
    %c253_i32 = arith.constant 253 : i32
    %14 = tpu.dynamic_rotate %0 by %c253_i32 dim 1 : vector<2x256xf32>, i32 -> vector<2x256xf32>
    %c252_i32 = arith.constant 252 : i32
    %15 = tpu.dynamic_rotate %0 by %c252_i32 dim 1 : vector<2x256xf32>, i32 -> vector<2x256xf32>
    %c0_2 = arith.constant 0 : index
    %16 = memref.load %arg2[%c0_2] : memref<72xf32, #tpu.memory_space<smem>>
    %17 = vector.broadcast %16 : f32 to vector<2x256xf32>
    %18 = arith.mulf %17, %12 : vector<2x256xf32>
    %c1 = arith.constant 1 : index
    %19 = memref.load %arg2[%c1] : memref<72xf32, #tpu.memory_space<smem>>
    %20 = vector.broadcast %19 : f32 to vector<2x256xf32>
    %21 = arith.mulf %20, %13 : vector<2x256xf32>
    %22 = arith.addf %18, %21 : vector<2x256xf32>
    %c2 = arith.constant 2 : index
    %23 = memref.load %arg2[%c2] : memref<72xf32, #tpu.memory_space<smem>>
    %24 = vector.broadcast %23 : f32 to vector<2x256xf32>
    %25 = arith.mulf %24, %7 : vector<2x256xf32>
    %26 = arith.addf %22, %25 : vector<2x256xf32>
    %c3 = arith.constant 3 : index
    %27 = memref.load %arg2[%c3] : memref<72xf32, #tpu.memory_space<smem>>
    %28 = vector.broadcast %27 : f32 to vector<2x256xf32>
    %29 = arith.mulf %28, %2 : vector<2x256xf32>
    %30 = arith.addf %26, %29 : vector<2x256xf32>
    %c4 = arith.constant 4 : index
    %31 = memref.load %arg2[%c4] : memref<72xf32, #tpu.memory_space<smem>>
    %32 = vector.broadcast %31 : f32 to vector<2x256xf32>
    %33 = arith.mulf %32, %0 : vector<2x256xf32>
    %34 = arith.addf %30, %33 : vector<2x256xf32>
    %c5 = arith.constant 5 : index
    %35 = memref.load %arg2[%c5] : memref<72xf32, #tpu.memory_space<smem>>
    %36 = vector.broadcast %35 : f32 to vector<2x256xf32>
    %37 = arith.mulf %36, %1 : vector<2x256xf32>
    %38 = arith.addf %34, %37 : vector<2x256xf32>
    %c6 = arith.constant 6 : index
    %39 = memref.load %arg2[%c6] : memref<72xf32, #tpu.memory_space<smem>>
    %40 = vector.broadcast %39 : f32 to vector<2x256xf32>
    %41 = arith.mulf %40, %6 : vector<2x256xf32>
    %42 = arith.addf %38, %41 : vector<2x256xf32>
    %c7 = arith.constant 7 : index
    %43 = memref.load %arg2[%c7] : memref<72xf32, #tpu.memory_space<smem>>
    %44 = vector.broadcast %43 : f32 to vector<2x256xf32>
    %45 = arith.mulf %44, %14 : vector<2x256xf32>
    %46 = arith.addf %42, %45 : vector<2x256xf32>
    %c8 = arith.constant 8 : index
    %47 = memref.load %arg2[%c8] : memref<72xf32, #tpu.memory_space<smem>>
    %48 = vector.broadcast %47 : f32 to vector<2x256xf32>
    %49 = arith.mulf %48, %15 : vector<2x256xf32>
    %50 = arith.addf %46, %49 : vector<2x256xf32>
    %c0_3 = arith.constant 0 : index
    %51 = memref.load %arg3[%c0_3] : memref<8xf32, #tpu.memory_space<smem>>
    %52 = vector.broadcast %51 : f32 to vector<2x256xf32>
    %53 = arith.addf %50, %52 : vector<2x256xf32>
    %cst_4 = arith.constant 0.000000e+00 : f32
    %54 = vector.broadcast %cst_4 : f32 to vector<2x256xf32>
    %55 = arith.maximumf %53, %54 : vector<2x256xf32>
    %c9 = arith.constant 9 : index
    %56 = memref.load %arg2[%c9] : memref<72xf32, #tpu.memory_space<smem>>
    %57 = vector.broadcast %56 : f32 to vector<2x256xf32>
    %58 = arith.mulf %57, %12 : vector<2x256xf32>
    %c10 = arith.constant 10 : index
    %59 = memref.load %arg2[%c10] : memref<72xf32, #tpu.memory_space<smem>>
    %60 = vector.broadcast %59 : f32 to vector<2x256xf32>
    %61 = arith.mulf %60, %13 : vector<2x256xf32>
    %62 = arith.addf %58, %61 : vector<2x256xf32>
    %c11 = arith.constant 11 : index
    %63 = memref.load %arg2[%c11] : memref<72xf32, #tpu.memory_space<smem>>
    %64 = vector.broadcast %63 : f32 to vector<2x256xf32>
    %65 = arith.mulf %64, %7 : vector<2x256xf32>
    %66 = arith.addf %62, %65 : vector<2x256xf32>
    %c12 = arith.constant 12 : index
    %67 = memref.load %arg2[%c12] : memref<72xf32, #tpu.memory_space<smem>>
    %68 = vector.broadcast %67 : f32 to vector<2x256xf32>
    %69 = arith.mulf %68, %2 : vector<2x256xf32>
    %70 = arith.addf %66, %69 : vector<2x256xf32>
    %c13 = arith.constant 13 : index
    %71 = memref.load %arg2[%c13] : memref<72xf32, #tpu.memory_space<smem>>
    %72 = vector.broadcast %71 : f32 to vector<2x256xf32>
    %73 = arith.mulf %72, %0 : vector<2x256xf32>
    %74 = arith.addf %70, %73 : vector<2x256xf32>
    %c14 = arith.constant 14 : index
    %75 = memref.load %arg2[%c14] : memref<72xf32, #tpu.memory_space<smem>>
    %76 = vector.broadcast %75 : f32 to vector<2x256xf32>
    %77 = arith.mulf %76, %1 : vector<2x256xf32>
    %78 = arith.addf %74, %77 : vector<2x256xf32>
    %c15 = arith.constant 15 : index
    %79 = memref.load %arg2[%c15] : memref<72xf32, #tpu.memory_space<smem>>
    %80 = vector.broadcast %79 : f32 to vector<2x256xf32>
    %81 = arith.mulf %80, %6 : vector<2x256xf32>
    %82 = arith.addf %78, %81 : vector<2x256xf32>
    %c16 = arith.constant 16 : index
    %83 = memref.load %arg2[%c16] : memref<72xf32, #tpu.memory_space<smem>>
    %84 = vector.broadcast %83 : f32 to vector<2x256xf32>
    %85 = arith.mulf %84, %14 : vector<2x256xf32>
    %86 = arith.addf %82, %85 : vector<2x256xf32>
    %c17 = arith.constant 17 : index
    %87 = memref.load %arg2[%c17] : memref<72xf32, #tpu.memory_space<smem>>
    %88 = vector.broadcast %87 : f32 to vector<2x256xf32>
    %89 = arith.mulf %88, %15 : vector<2x256xf32>
    %90 = arith.addf %86, %89 : vector<2x256xf32>
    %c1_5 = arith.constant 1 : index
    %91 = memref.load %arg3[%c1_5] : memref<8xf32, #tpu.memory_space<smem>>
    %92 = vector.broadcast %91 : f32 to vector<2x256xf32>
    %93 = arith.addf %90, %92 : vector<2x256xf32>
    %cst_6 = arith.constant 0.000000e+00 : f32
    %94 = vector.broadcast %cst_6 : f32 to vector<2x256xf32>
    %95 = arith.maximumf %93, %94 : vector<2x256xf32>
    %c18 = arith.constant 18 : index
    %96 = memref.load %arg2[%c18] : memref<72xf32, #tpu.memory_space<smem>>
    %97 = vector.broadcast %96 : f32 to vector<2x256xf32>
    %98 = arith.mulf %97, %12 : vector<2x256xf32>
    %c19 = arith.constant 19 : index
    %99 = memref.load %arg2[%c19] : memref<72xf32, #tpu.memory_space<smem>>
    %100 = vector.broadcast %99 : f32 to vector<2x256xf32>
    %101 = arith.mulf %100, %13 : vector<2x256xf32>
    %102 = arith.addf %98, %101 : vector<2x256xf32>
    %c20 = arith.constant 20 : index
    %103 = memref.load %arg2[%c20] : memref<72xf32, #tpu.memory_space<smem>>
    %104 = vector.broadcast %103 : f32 to vector<2x256xf32>
    %105 = arith.mulf %104, %7 : vector<2x256xf32>
    %106 = arith.addf %102, %105 : vector<2x256xf32>
    %c21 = arith.constant 21 : index
    %107 = memref.load %arg2[%c21] : memref<72xf32, #tpu.memory_space<smem>>
    %108 = vector.broadcast %107 : f32 to vector<2x256xf32>
    %109 = arith.mulf %108, %2 : vector<2x256xf32>
    %110 = arith.addf %106, %109 : vector<2x256xf32>
    %c22 = arith.constant 22 : index
    %111 = memref.load %arg2[%c22] : memref<72xf32, #tpu.memory_space<smem>>
    %112 = vector.broadcast %111 : f32 to vector<2x256xf32>
    %113 = arith.mulf %112, %0 : vector<2x256xf32>
    %114 = arith.addf %110, %113 : vector<2x256xf32>
    %c23 = arith.constant 23 : index
    %115 = memref.load %arg2[%c23] : memref<72xf32, #tpu.memory_space<smem>>
    %116 = vector.broadcast %115 : f32 to vector<2x256xf32>
    %117 = arith.mulf %116, %1 : vector<2x256xf32>
    %118 = arith.addf %114, %117 : vector<2x256xf32>
    %c24 = arith.constant 24 : index
    %119 = memref.load %arg2[%c24] : memref<72xf32, #tpu.memory_space<smem>>
    %120 = vector.broadcast %119 : f32 to vector<2x256xf32>
    %121 = arith.mulf %120, %6 : vector<2x256xf32>
    %122 = arith.addf %118, %121 : vector<2x256xf32>
    %c25 = arith.constant 25 : index
    %123 = memref.load %arg2[%c25] : memref<72xf32, #tpu.memory_space<smem>>
    %124 = vector.broadcast %123 : f32 to vector<2x256xf32>
    %125 = arith.mulf %124, %14 : vector<2x256xf32>
    %126 = arith.addf %122, %125 : vector<2x256xf32>
    %c26 = arith.constant 26 : index
    %127 = memref.load %arg2[%c26] : memref<72xf32, #tpu.memory_space<smem>>
    %128 = vector.broadcast %127 : f32 to vector<2x256xf32>
    %129 = arith.mulf %128, %15 : vector<2x256xf32>
    %130 = arith.addf %126, %129 : vector<2x256xf32>
    %c2_7 = arith.constant 2 : index
    %131 = memref.load %arg3[%c2_7] : memref<8xf32, #tpu.memory_space<smem>>
    %132 = vector.broadcast %131 : f32 to vector<2x256xf32>
    %133 = arith.addf %130, %132 : vector<2x256xf32>
    %cst_8 = arith.constant 0.000000e+00 : f32
    %134 = vector.broadcast %cst_8 : f32 to vector<2x256xf32>
    %135 = arith.maximumf %133, %134 : vector<2x256xf32>
    %c27 = arith.constant 27 : index
    %136 = memref.load %arg2[%c27] : memref<72xf32, #tpu.memory_space<smem>>
    %137 = vector.broadcast %136 : f32 to vector<2x256xf32>
    %138 = arith.mulf %137, %12 : vector<2x256xf32>
    %c28 = arith.constant 28 : index
    %139 = memref.load %arg2[%c28] : memref<72xf32, #tpu.memory_space<smem>>
    %140 = vector.broadcast %139 : f32 to vector<2x256xf32>
    %141 = arith.mulf %140, %13 : vector<2x256xf32>
    %142 = arith.addf %138, %141 : vector<2x256xf32>
    %c29 = arith.constant 29 : index
    %143 = memref.load %arg2[%c29] : memref<72xf32, #tpu.memory_space<smem>>
    %144 = vector.broadcast %143 : f32 to vector<2x256xf32>
    %145 = arith.mulf %144, %7 : vector<2x256xf32>
    %146 = arith.addf %142, %145 : vector<2x256xf32>
    %c30 = arith.constant 30 : index
    %147 = memref.load %arg2[%c30] : memref<72xf32, #tpu.memory_space<smem>>
    %148 = vector.broadcast %147 : f32 to vector<2x256xf32>
    %149 = arith.mulf %148, %2 : vector<2x256xf32>
    %150 = arith.addf %146, %149 : vector<2x256xf32>
    %c31 = arith.constant 31 : index
    %151 = memref.load %arg2[%c31] : memref<72xf32, #tpu.memory_space<smem>>
    %152 = vector.broadcast %151 : f32 to vector<2x256xf32>
    %153 = arith.mulf %152, %0 : vector<2x256xf32>
    %154 = arith.addf %150, %153 : vector<2x256xf32>
    %c32 = arith.constant 32 : index
    %155 = memref.load %arg2[%c32] : memref<72xf32, #tpu.memory_space<smem>>
    %156 = vector.broadcast %155 : f32 to vector<2x256xf32>
    %157 = arith.mulf %156, %1 : vector<2x256xf32>
    %158 = arith.addf %154, %157 : vector<2x256xf32>
    %c33 = arith.constant 33 : index
    %159 = memref.load %arg2[%c33] : memref<72xf32, #tpu.memory_space<smem>>
    %160 = vector.broadcast %159 : f32 to vector<2x256xf32>
    %161 = arith.mulf %160, %6 : vector<2x256xf32>
    %162 = arith.addf %158, %161 : vector<2x256xf32>
    %c34 = arith.constant 34 : index
    %163 = memref.load %arg2[%c34] : memref<72xf32, #tpu.memory_space<smem>>
    %164 = vector.broadcast %163 : f32 to vector<2x256xf32>
    %165 = arith.mulf %164, %14 : vector<2x256xf32>
    %166 = arith.addf %162, %165 : vector<2x256xf32>
    %c35 = arith.constant 35 : index
    %167 = memref.load %arg2[%c35] : memref<72xf32, #tpu.memory_space<smem>>
    %168 = vector.broadcast %167 : f32 to vector<2x256xf32>
    %169 = arith.mulf %168, %15 : vector<2x256xf32>
    %170 = arith.addf %166, %169 : vector<2x256xf32>
    %c3_9 = arith.constant 3 : index
    %171 = memref.load %arg3[%c3_9] : memref<8xf32, #tpu.memory_space<smem>>
    %172 = vector.broadcast %171 : f32 to vector<2x256xf32>
    %173 = arith.addf %170, %172 : vector<2x256xf32>
    %cst_10 = arith.constant 0.000000e+00 : f32
    %174 = vector.broadcast %cst_10 : f32 to vector<2x256xf32>
    %175 = arith.maximumf %173, %174 : vector<2x256xf32>
    %c36 = arith.constant 36 : index
    %176 = memref.load %arg2[%c36] : memref<72xf32, #tpu.memory_space<smem>>
    %177 = vector.broadcast %176 : f32 to vector<2x256xf32>
    %178 = arith.mulf %177, %12 : vector<2x256xf32>
    %c37 = arith.constant 37 : index
    %179 = memref.load %arg2[%c37] : memref<72xf32, #tpu.memory_space<smem>>
    %180 = vector.broadcast %179 : f32 to vector<2x256xf32>
    %181 = arith.mulf %180, %13 : vector<2x256xf32>
    %182 = arith.addf %178, %181 : vector<2x256xf32>
    %c38 = arith.constant 38 : index
    %183 = memref.load %arg2[%c38] : memref<72xf32, #tpu.memory_space<smem>>
    %184 = vector.broadcast %183 : f32 to vector<2x256xf32>
    %185 = arith.mulf %184, %7 : vector<2x256xf32>
    %186 = arith.addf %182, %185 : vector<2x256xf32>
    %c39 = arith.constant 39 : index
    %187 = memref.load %arg2[%c39] : memref<72xf32, #tpu.memory_space<smem>>
    %188 = vector.broadcast %187 : f32 to vector<2x256xf32>
    %189 = arith.mulf %188, %2 : vector<2x256xf32>
    %190 = arith.addf %186, %189 : vector<2x256xf32>
    %c40 = arith.constant 40 : index
    %191 = memref.load %arg2[%c40] : memref<72xf32, #tpu.memory_space<smem>>
    %192 = vector.broadcast %191 : f32 to vector<2x256xf32>
    %193 = arith.mulf %192, %0 : vector<2x256xf32>
    %194 = arith.addf %190, %193 : vector<2x256xf32>
    %c41 = arith.constant 41 : index
    %195 = memref.load %arg2[%c41] : memref<72xf32, #tpu.memory_space<smem>>
    %196 = vector.broadcast %195 : f32 to vector<2x256xf32>
    %197 = arith.mulf %196, %1 : vector<2x256xf32>
    %198 = arith.addf %194, %197 : vector<2x256xf32>
    %c42 = arith.constant 42 : index
    %199 = memref.load %arg2[%c42] : memref<72xf32, #tpu.memory_space<smem>>
    %200 = vector.broadcast %199 : f32 to vector<2x256xf32>
    %201 = arith.mulf %200, %6 : vector<2x256xf32>
    %202 = arith.addf %198, %201 : vector<2x256xf32>
    %c43 = arith.constant 43 : index
    %203 = memref.load %arg2[%c43] : memref<72xf32, #tpu.memory_space<smem>>
    %204 = vector.broadcast %203 : f32 to vector<2x256xf32>
    %205 = arith.mulf %204, %14 : vector<2x256xf32>
    %206 = arith.addf %202, %205 : vector<2x256xf32>
    %c44 = arith.constant 44 : index
    %207 = memref.load %arg2[%c44] : memref<72xf32, #tpu.memory_space<smem>>
    %208 = vector.broadcast %207 : f32 to vector<2x256xf32>
    %209 = arith.mulf %208, %15 : vector<2x256xf32>
    %210 = arith.addf %206, %209 : vector<2x256xf32>
    %c4_11 = arith.constant 4 : index
    %211 = memref.load %arg3[%c4_11] : memref<8xf32, #tpu.memory_space<smem>>
    %212 = vector.broadcast %211 : f32 to vector<2x256xf32>
    %213 = arith.addf %210, %212 : vector<2x256xf32>
    %cst_12 = arith.constant 0.000000e+00 : f32
    %214 = vector.broadcast %cst_12 : f32 to vector<2x256xf32>
    %215 = arith.maximumf %213, %214 : vector<2x256xf32>
    %c45 = arith.constant 45 : index
    %216 = memref.load %arg2[%c45] : memref<72xf32, #tpu.memory_space<smem>>
    %217 = vector.broadcast %216 : f32 to vector<2x256xf32>
    %218 = arith.mulf %217, %12 : vector<2x256xf32>
    %c46 = arith.constant 46 : index
    %219 = memref.load %arg2[%c46] : memref<72xf32, #tpu.memory_space<smem>>
    %220 = vector.broadcast %219 : f32 to vector<2x256xf32>
    %221 = arith.mulf %220, %13 : vector<2x256xf32>
    %222 = arith.addf %218, %221 : vector<2x256xf32>
    %c47 = arith.constant 47 : index
    %223 = memref.load %arg2[%c47] : memref<72xf32, #tpu.memory_space<smem>>
    %224 = vector.broadcast %223 : f32 to vector<2x256xf32>
    %225 = arith.mulf %224, %7 : vector<2x256xf32>
    %226 = arith.addf %222, %225 : vector<2x256xf32>
    %c48 = arith.constant 48 : index
    %227 = memref.load %arg2[%c48] : memref<72xf32, #tpu.memory_space<smem>>
    %228 = vector.broadcast %227 : f32 to vector<2x256xf32>
    %229 = arith.mulf %228, %2 : vector<2x256xf32>
    %230 = arith.addf %226, %229 : vector<2x256xf32>
    %c49 = arith.constant 49 : index
    %231 = memref.load %arg2[%c49] : memref<72xf32, #tpu.memory_space<smem>>
    %232 = vector.broadcast %231 : f32 to vector<2x256xf32>
    %233 = arith.mulf %232, %0 : vector<2x256xf32>
    %234 = arith.addf %230, %233 : vector<2x256xf32>
    %c50 = arith.constant 50 : index
    %235 = memref.load %arg2[%c50] : memref<72xf32, #tpu.memory_space<smem>>
    %236 = vector.broadcast %235 : f32 to vector<2x256xf32>
    %237 = arith.mulf %236, %1 : vector<2x256xf32>
    %238 = arith.addf %234, %237 : vector<2x256xf32>
    %c51 = arith.constant 51 : index
    %239 = memref.load %arg2[%c51] : memref<72xf32, #tpu.memory_space<smem>>
    %240 = vector.broadcast %239 : f32 to vector<2x256xf32>
    %241 = arith.mulf %240, %6 : vector<2x256xf32>
    %242 = arith.addf %238, %241 : vector<2x256xf32>
    %c52 = arith.constant 52 : index
    %243 = memref.load %arg2[%c52] : memref<72xf32, #tpu.memory_space<smem>>
    %244 = vector.broadcast %243 : f32 to vector<2x256xf32>
    %245 = arith.mulf %244, %14 : vector<2x256xf32>
    %246 = arith.addf %242, %245 : vector<2x256xf32>
    %c53 = arith.constant 53 : index
    %247 = memref.load %arg2[%c53] : memref<72xf32, #tpu.memory_space<smem>>
    %248 = vector.broadcast %247 : f32 to vector<2x256xf32>
    %249 = arith.mulf %248, %15 : vector<2x256xf32>
    %250 = arith.addf %246, %249 : vector<2x256xf32>
    %c5_13 = arith.constant 5 : index
    %251 = memref.load %arg3[%c5_13] : memref<8xf32, #tpu.memory_space<smem>>
    %252 = vector.broadcast %251 : f32 to vector<2x256xf32>
    %253 = arith.addf %250, %252 : vector<2x256xf32>
    %cst_14 = arith.constant 0.000000e+00 : f32
    %254 = vector.broadcast %cst_14 : f32 to vector<2x256xf32>
    %255 = arith.maximumf %253, %254 : vector<2x256xf32>
    %c54 = arith.constant 54 : index
    %256 = memref.load %arg2[%c54] : memref<72xf32, #tpu.memory_space<smem>>
    %257 = vector.broadcast %256 : f32 to vector<2x256xf32>
    %258 = arith.mulf %257, %12 : vector<2x256xf32>
    %c55 = arith.constant 55 : index
    %259 = memref.load %arg2[%c55] : memref<72xf32, #tpu.memory_space<smem>>
    %260 = vector.broadcast %259 : f32 to vector<2x256xf32>
    %261 = arith.mulf %260, %13 : vector<2x256xf32>
    %262 = arith.addf %258, %261 : vector<2x256xf32>
    %c56 = arith.constant 56 : index
    %263 = memref.load %arg2[%c56] : memref<72xf32, #tpu.memory_space<smem>>
    %264 = vector.broadcast %263 : f32 to vector<2x256xf32>
    %265 = arith.mulf %264, %7 : vector<2x256xf32>
    %266 = arith.addf %262, %265 : vector<2x256xf32>
    %c57 = arith.constant 57 : index
    %267 = memref.load %arg2[%c57] : memref<72xf32, #tpu.memory_space<smem>>
    %268 = vector.broadcast %267 : f32 to vector<2x256xf32>
    %269 = arith.mulf %268, %2 : vector<2x256xf32>
    %270 = arith.addf %266, %269 : vector<2x256xf32>
    %c58 = arith.constant 58 : index
    %271 = memref.load %arg2[%c58] : memref<72xf32, #tpu.memory_space<smem>>
    %272 = vector.broadcast %271 : f32 to vector<2x256xf32>
    %273 = arith.mulf %272, %0 : vector<2x256xf32>
    %274 = arith.addf %270, %273 : vector<2x256xf32>
    %c59 = arith.constant 59 : index
    %275 = memref.load %arg2[%c59] : memref<72xf32, #tpu.memory_space<smem>>
    %276 = vector.broadcast %275 : f32 to vector<2x256xf32>
    %277 = arith.mulf %276, %1 : vector<2x256xf32>
    %278 = arith.addf %274, %277 : vector<2x256xf32>
    %c60 = arith.constant 60 : index
    %279 = memref.load %arg2[%c60] : memref<72xf32, #tpu.memory_space<smem>>
    %280 = vector.broadcast %279 : f32 to vector<2x256xf32>
    %281 = arith.mulf %280, %6 : vector<2x256xf32>
    %282 = arith.addf %278, %281 : vector<2x256xf32>
    %c61 = arith.constant 61 : index
    %283 = memref.load %arg2[%c61] : memref<72xf32, #tpu.memory_space<smem>>
    %284 = vector.broadcast %283 : f32 to vector<2x256xf32>
    %285 = arith.mulf %284, %14 : vector<2x256xf32>
    %286 = arith.addf %282, %285 : vector<2x256xf32>
    %c62 = arith.constant 62 : index
    %287 = memref.load %arg2[%c62] : memref<72xf32, #tpu.memory_space<smem>>
    %288 = vector.broadcast %287 : f32 to vector<2x256xf32>
    %289 = arith.mulf %288, %15 : vector<2x256xf32>
    %290 = arith.addf %286, %289 : vector<2x256xf32>
    %c6_15 = arith.constant 6 : index
    %291 = memref.load %arg3[%c6_15] : memref<8xf32, #tpu.memory_space<smem>>
    %292 = vector.broadcast %291 : f32 to vector<2x256xf32>
    %293 = arith.addf %290, %292 : vector<2x256xf32>
    %cst_16 = arith.constant 0.000000e+00 : f32
    %294 = vector.broadcast %cst_16 : f32 to vector<2x256xf32>
    %295 = arith.maximumf %293, %294 : vector<2x256xf32>
    %c63 = arith.constant 63 : index
    %296 = memref.load %arg2[%c63] : memref<72xf32, #tpu.memory_space<smem>>
    %297 = vector.broadcast %296 : f32 to vector<2x256xf32>
    %298 = arith.mulf %297, %12 : vector<2x256xf32>
    %c64 = arith.constant 64 : index
    %299 = memref.load %arg2[%c64] : memref<72xf32, #tpu.memory_space<smem>>
    %300 = vector.broadcast %299 : f32 to vector<2x256xf32>
    %301 = arith.mulf %300, %13 : vector<2x256xf32>
    %302 = arith.addf %298, %301 : vector<2x256xf32>
    %c65 = arith.constant 65 : index
    %303 = memref.load %arg2[%c65] : memref<72xf32, #tpu.memory_space<smem>>
    %304 = vector.broadcast %303 : f32 to vector<2x256xf32>
    %305 = arith.mulf %304, %7 : vector<2x256xf32>
    %306 = arith.addf %302, %305 : vector<2x256xf32>
    %c66 = arith.constant 66 : index
    %307 = memref.load %arg2[%c66] : memref<72xf32, #tpu.memory_space<smem>>
    %308 = vector.broadcast %307 : f32 to vector<2x256xf32>
    %309 = arith.mulf %308, %2 : vector<2x256xf32>
    %310 = arith.addf %306, %309 : vector<2x256xf32>
    %c67 = arith.constant 67 : index
    %311 = memref.load %arg2[%c67] : memref<72xf32, #tpu.memory_space<smem>>
    %312 = vector.broadcast %311 : f32 to vector<2x256xf32>
    %313 = arith.mulf %312, %0 : vector<2x256xf32>
    %314 = arith.addf %310, %313 : vector<2x256xf32>
    %c68 = arith.constant 68 : index
    %315 = memref.load %arg2[%c68] : memref<72xf32, #tpu.memory_space<smem>>
    %316 = vector.broadcast %315 : f32 to vector<2x256xf32>
    %317 = arith.mulf %316, %1 : vector<2x256xf32>
    %318 = arith.addf %314, %317 : vector<2x256xf32>
    %c69 = arith.constant 69 : index
    %319 = memref.load %arg2[%c69] : memref<72xf32, #tpu.memory_space<smem>>
    %320 = vector.broadcast %319 : f32 to vector<2x256xf32>
    %321 = arith.mulf %320, %6 : vector<2x256xf32>
    %322 = arith.addf %318, %321 : vector<2x256xf32>
    %c70 = arith.constant 70 : index
    %323 = memref.load %arg2[%c70] : memref<72xf32, #tpu.memory_space<smem>>
    %324 = vector.broadcast %323 : f32 to vector<2x256xf32>
    %325 = arith.mulf %324, %14 : vector<2x256xf32>
    %326 = arith.addf %322, %325 : vector<2x256xf32>
    %c71 = arith.constant 71 : index
    %327 = memref.load %arg2[%c71] : memref<72xf32, #tpu.memory_space<smem>>
    %328 = vector.broadcast %327 : f32 to vector<2x256xf32>
    %329 = arith.mulf %328, %15 : vector<2x256xf32>
    %330 = arith.addf %326, %329 : vector<2x256xf32>
    %c7_17 = arith.constant 7 : index
    %331 = memref.load %arg3[%c7_17] : memref<8xf32, #tpu.memory_space<smem>>
    %332 = vector.broadcast %331 : f32 to vector<2x256xf32>
    %333 = arith.addf %330, %332 : vector<2x256xf32>
    %cst_18 = arith.constant 0.000000e+00 : f32
    %334 = vector.broadcast %cst_18 : f32 to vector<2x256xf32>
    %335 = arith.maximumf %333, %334 : vector<2x256xf32>
    %c0_19 = arith.constant 0 : index
    %336 = memref.load %arg4[%c0_19] : memref<40xf32, #tpu.memory_space<smem>>
    %337 = vector.broadcast %336 : f32 to vector<2x256xf32>
    %338 = arith.mulf %337, %55 : vector<2x256xf32>
    %c1_20 = arith.constant 1 : index
    %339 = memref.load %arg4[%c1_20] : memref<40xf32, #tpu.memory_space<smem>>
    %340 = vector.broadcast %339 : f32 to vector<2x256xf32>
    %341 = arith.mulf %340, %95 : vector<2x256xf32>
    %342 = arith.addf %338, %341 : vector<2x256xf32>
    %c2_21 = arith.constant 2 : index
    %343 = memref.load %arg4[%c2_21] : memref<40xf32, #tpu.memory_space<smem>>
    %344 = vector.broadcast %343 : f32 to vector<2x256xf32>
    %345 = arith.mulf %344, %135 : vector<2x256xf32>
    %346 = arith.addf %342, %345 : vector<2x256xf32>
    %c3_22 = arith.constant 3 : index
    %347 = memref.load %arg4[%c3_22] : memref<40xf32, #tpu.memory_space<smem>>
    %348 = vector.broadcast %347 : f32 to vector<2x256xf32>
    %349 = arith.mulf %348, %175 : vector<2x256xf32>
    %350 = arith.addf %346, %349 : vector<2x256xf32>
    %c4_23 = arith.constant 4 : index
    %351 = memref.load %arg4[%c4_23] : memref<40xf32, #tpu.memory_space<smem>>
    %352 = vector.broadcast %351 : f32 to vector<2x256xf32>
    %353 = arith.mulf %352, %215 : vector<2x256xf32>
    %354 = arith.addf %350, %353 : vector<2x256xf32>
    %c5_24 = arith.constant 5 : index
    %355 = memref.load %arg4[%c5_24] : memref<40xf32, #tpu.memory_space<smem>>
    %356 = vector.broadcast %355 : f32 to vector<2x256xf32>
    %357 = arith.mulf %356, %255 : vector<2x256xf32>
    %358 = arith.addf %354, %357 : vector<2x256xf32>
    %c6_25 = arith.constant 6 : index
    %359 = memref.load %arg4[%c6_25] : memref<40xf32, #tpu.memory_space<smem>>
    %360 = vector.broadcast %359 : f32 to vector<2x256xf32>
    %361 = arith.mulf %360, %295 : vector<2x256xf32>
    %362 = arith.addf %358, %361 : vector<2x256xf32>
    %c7_26 = arith.constant 7 : index
    %363 = memref.load %arg4[%c7_26] : memref<40xf32, #tpu.memory_space<smem>>
    %364 = vector.broadcast %363 : f32 to vector<2x256xf32>
    %365 = arith.mulf %364, %335 : vector<2x256xf32>
    %366 = arith.addf %362, %365 : vector<2x256xf32>
    %c2_i32_27 = arith.constant 2 : i32
    %367 = tpu.dynamic_rotate %366 by %c2_i32_27 dim 1 : vector<2x256xf32>, i32 -> vector<2x256xf32>
    %c8_28 = arith.constant 8 : index
    %368 = memref.load %arg4[%c8_28] : memref<40xf32, #tpu.memory_space<smem>>
    %369 = vector.broadcast %368 : f32 to vector<2x256xf32>
    %370 = arith.mulf %369, %55 : vector<2x256xf32>
    %c9_29 = arith.constant 9 : index
    %371 = memref.load %arg4[%c9_29] : memref<40xf32, #tpu.memory_space<smem>>
    %372 = vector.broadcast %371 : f32 to vector<2x256xf32>
    %373 = arith.mulf %372, %95 : vector<2x256xf32>
    %374 = arith.addf %370, %373 : vector<2x256xf32>
    %c10_30 = arith.constant 10 : index
    %375 = memref.load %arg4[%c10_30] : memref<40xf32, #tpu.memory_space<smem>>
    %376 = vector.broadcast %375 : f32 to vector<2x256xf32>
    %377 = arith.mulf %376, %135 : vector<2x256xf32>
    %378 = arith.addf %374, %377 : vector<2x256xf32>
    %c11_31 = arith.constant 11 : index
    %379 = memref.load %arg4[%c11_31] : memref<40xf32, #tpu.memory_space<smem>>
    %380 = vector.broadcast %379 : f32 to vector<2x256xf32>
    %381 = arith.mulf %380, %175 : vector<2x256xf32>
    %382 = arith.addf %378, %381 : vector<2x256xf32>
    %c12_32 = arith.constant 12 : index
    %383 = memref.load %arg4[%c12_32] : memref<40xf32, #tpu.memory_space<smem>>
    %384 = vector.broadcast %383 : f32 to vector<2x256xf32>
    %385 = arith.mulf %384, %215 : vector<2x256xf32>
    %386 = arith.addf %382, %385 : vector<2x256xf32>
    %c13_33 = arith.constant 13 : index
    %387 = memref.load %arg4[%c13_33] : memref<40xf32, #tpu.memory_space<smem>>
    %388 = vector.broadcast %387 : f32 to vector<2x256xf32>
    %389 = arith.mulf %388, %255 : vector<2x256xf32>
    %390 = arith.addf %386, %389 : vector<2x256xf32>
    %c14_34 = arith.constant 14 : index
    %391 = memref.load %arg4[%c14_34] : memref<40xf32, #tpu.memory_space<smem>>
    %392 = vector.broadcast %391 : f32 to vector<2x256xf32>
    %393 = arith.mulf %392, %295 : vector<2x256xf32>
    %394 = arith.addf %390, %393 : vector<2x256xf32>
    %c15_35 = arith.constant 15 : index
    %395 = memref.load %arg4[%c15_35] : memref<40xf32, #tpu.memory_space<smem>>
    %396 = vector.broadcast %395 : f32 to vector<2x256xf32>
    %397 = arith.mulf %396, %335 : vector<2x256xf32>
    %398 = arith.addf %394, %397 : vector<2x256xf32>
    %c1_i32_36 = arith.constant 1 : i32
    %399 = tpu.dynamic_rotate %398 by %c1_i32_36 dim 1 : vector<2x256xf32>, i32 -> vector<2x256xf32>
    %400 = arith.addf %367, %399 : vector<2x256xf32>
    %c16_37 = arith.constant 16 : index
    %401 = memref.load %arg4[%c16_37] : memref<40xf32, #tpu.memory_space<smem>>
    %402 = vector.broadcast %401 : f32 to vector<2x256xf32>
    %403 = arith.mulf %402, %55 : vector<2x256xf32>
    %c17_38 = arith.constant 17 : index
    %404 = memref.load %arg4[%c17_38] : memref<40xf32, #tpu.memory_space<smem>>
    %405 = vector.broadcast %404 : f32 to vector<2x256xf32>
    %406 = arith.mulf %405, %95 : vector<2x256xf32>
    %407 = arith.addf %403, %406 : vector<2x256xf32>
    %c18_39 = arith.constant 18 : index
    %408 = memref.load %arg4[%c18_39] : memref<40xf32, #tpu.memory_space<smem>>
    %409 = vector.broadcast %408 : f32 to vector<2x256xf32>
    %410 = arith.mulf %409, %135 : vector<2x256xf32>
    %411 = arith.addf %407, %410 : vector<2x256xf32>
    %c19_40 = arith.constant 19 : index
    %412 = memref.load %arg4[%c19_40] : memref<40xf32, #tpu.memory_space<smem>>
    %413 = vector.broadcast %412 : f32 to vector<2x256xf32>
    %414 = arith.mulf %413, %175 : vector<2x256xf32>
    %415 = arith.addf %411, %414 : vector<2x256xf32>
    %c20_41 = arith.constant 20 : index
    %416 = memref.load %arg4[%c20_41] : memref<40xf32, #tpu.memory_space<smem>>
    %417 = vector.broadcast %416 : f32 to vector<2x256xf32>
    %418 = arith.mulf %417, %215 : vector<2x256xf32>
    %419 = arith.addf %415, %418 : vector<2x256xf32>
    %c21_42 = arith.constant 21 : index
    %420 = memref.load %arg4[%c21_42] : memref<40xf32, #tpu.memory_space<smem>>
    %421 = vector.broadcast %420 : f32 to vector<2x256xf32>
    %422 = arith.mulf %421, %255 : vector<2x256xf32>
    %423 = arith.addf %419, %422 : vector<2x256xf32>
    %c22_43 = arith.constant 22 : index
    %424 = memref.load %arg4[%c22_43] : memref<40xf32, #tpu.memory_space<smem>>
    %425 = vector.broadcast %424 : f32 to vector<2x256xf32>
    %426 = arith.mulf %425, %295 : vector<2x256xf32>
    %427 = arith.addf %423, %426 : vector<2x256xf32>
    %c23_44 = arith.constant 23 : index
    %428 = memref.load %arg4[%c23_44] : memref<40xf32, #tpu.memory_space<smem>>
    %429 = vector.broadcast %428 : f32 to vector<2x256xf32>
    %430 = arith.mulf %429, %335 : vector<2x256xf32>
    %431 = arith.addf %427, %430 : vector<2x256xf32>
    %432 = arith.addf %400, %431 : vector<2x256xf32>
    %c24_45 = arith.constant 24 : index
    %433 = memref.load %arg4[%c24_45] : memref<40xf32, #tpu.memory_space<smem>>
    %434 = vector.broadcast %433 : f32 to vector<2x256xf32>
    %435 = arith.mulf %434, %55 : vector<2x256xf32>
    %c25_46 = arith.constant 25 : index
    %436 = memref.load %arg4[%c25_46] : memref<40xf32, #tpu.memory_space<smem>>
    %437 = vector.broadcast %436 : f32 to vector<2x256xf32>
    %438 = arith.mulf %437, %95 : vector<2x256xf32>
    %439 = arith.addf %435, %438 : vector<2x256xf32>
    %c26_47 = arith.constant 26 : index
    %440 = memref.load %arg4[%c26_47] : memref<40xf32, #tpu.memory_space<smem>>
    %441 = vector.broadcast %440 : f32 to vector<2x256xf32>
    %442 = arith.mulf %441, %135 : vector<2x256xf32>
    %443 = arith.addf %439, %442 : vector<2x256xf32>
    %c27_48 = arith.constant 27 : index
    %444 = memref.load %arg4[%c27_48] : memref<40xf32, #tpu.memory_space<smem>>
    %445 = vector.broadcast %444 : f32 to vector<2x256xf32>
    %446 = arith.mulf %445, %175 : vector<2x256xf32>
    %447 = arith.addf %443, %446 : vector<2x256xf32>
    %c28_49 = arith.constant 28 : index
    %448 = memref.load %arg4[%c28_49] : memref<40xf32, #tpu.memory_space<smem>>
    %449 = vector.broadcast %448 : f32 to vector<2x256xf32>
    %450 = arith.mulf %449, %215 : vector<2x256xf32>
    %451 = arith.addf %447, %450 : vector<2x256xf32>
    %c29_50 = arith.constant 29 : index
    %452 = memref.load %arg4[%c29_50] : memref<40xf32, #tpu.memory_space<smem>>
    %453 = vector.broadcast %452 : f32 to vector<2x256xf32>
    %454 = arith.mulf %453, %255 : vector<2x256xf32>
    %455 = arith.addf %451, %454 : vector<2x256xf32>
    %c30_51 = arith.constant 30 : index
    %456 = memref.load %arg4[%c30_51] : memref<40xf32, #tpu.memory_space<smem>>
    %457 = vector.broadcast %456 : f32 to vector<2x256xf32>
    %458 = arith.mulf %457, %295 : vector<2x256xf32>
    %459 = arith.addf %455, %458 : vector<2x256xf32>
    %c31_52 = arith.constant 31 : index
    %460 = memref.load %arg4[%c31_52] : memref<40xf32, #tpu.memory_space<smem>>
    %461 = vector.broadcast %460 : f32 to vector<2x256xf32>
    %462 = arith.mulf %461, %335 : vector<2x256xf32>
    %463 = arith.addf %459, %462 : vector<2x256xf32>
    %c255_i32_53 = arith.constant 255 : i32
    %464 = tpu.dynamic_rotate %463 by %c255_i32_53 dim 1 : vector<2x256xf32>, i32 -> vector<2x256xf32>
    %465 = arith.addf %432, %464 : vector<2x256xf32>
    %c32_54 = arith.constant 32 : index
    %466 = memref.load %arg4[%c32_54] : memref<40xf32, #tpu.memory_space<smem>>
    %467 = vector.broadcast %466 : f32 to vector<2x256xf32>
    %468 = arith.mulf %467, %55 : vector<2x256xf32>
    %c33_55 = arith.constant 33 : index
    %469 = memref.load %arg4[%c33_55] : memref<40xf32, #tpu.memory_space<smem>>
    %470 = vector.broadcast %469 : f32 to vector<2x256xf32>
    %471 = arith.mulf %470, %95 : vector<2x256xf32>
    %472 = arith.addf %468, %471 : vector<2x256xf32>
    %c34_56 = arith.constant 34 : index
    %473 = memref.load %arg4[%c34_56] : memref<40xf32, #tpu.memory_space<smem>>
    %474 = vector.broadcast %473 : f32 to vector<2x256xf32>
    %475 = arith.mulf %474, %135 : vector<2x256xf32>
    %476 = arith.addf %472, %475 : vector<2x256xf32>
    %c35_57 = arith.constant 35 : index
    %477 = memref.load %arg4[%c35_57] : memref<40xf32, #tpu.memory_space<smem>>
    %478 = vector.broadcast %477 : f32 to vector<2x256xf32>
    %479 = arith.mulf %478, %175 : vector<2x256xf32>
    %480 = arith.addf %476, %479 : vector<2x256xf32>
    %c36_58 = arith.constant 36 : index
    %481 = memref.load %arg4[%c36_58] : memref<40xf32, #tpu.memory_space<smem>>
    %482 = vector.broadcast %481 : f32 to vector<2x256xf32>
    %483 = arith.mulf %482, %215 : vector<2x256xf32>
    %484 = arith.addf %480, %483 : vector<2x256xf32>
    %c37_59 = arith.constant 37 : index
    %485 = memref.load %arg4[%c37_59] : memref<40xf32, #tpu.memory_space<smem>>
    %486 = vector.broadcast %485 : f32 to vector<2x256xf32>
    %487 = arith.mulf %486, %255 : vector<2x256xf32>
    %488 = arith.addf %484, %487 : vector<2x256xf32>
    %c38_60 = arith.constant 38 : index
    %489 = memref.load %arg4[%c38_60] : memref<40xf32, #tpu.memory_space<smem>>
    %490 = vector.broadcast %489 : f32 to vector<2x256xf32>
    %491 = arith.mulf %490, %295 : vector<2x256xf32>
    %492 = arith.addf %488, %491 : vector<2x256xf32>
    %c39_61 = arith.constant 39 : index
    %493 = memref.load %arg4[%c39_61] : memref<40xf32, #tpu.memory_space<smem>>
    %494 = vector.broadcast %493 : f32 to vector<2x256xf32>
    %495 = arith.mulf %494, %335 : vector<2x256xf32>
    %496 = arith.addf %492, %495 : vector<2x256xf32>
    %c254_i32_62 = arith.constant 254 : i32
    %497 = tpu.dynamic_rotate %496 by %c254_i32_62 dim 1 : vector<2x256xf32>, i32 -> vector<2x256xf32>
    %498 = arith.addf %465, %497 : vector<2x256xf32>
    %c0_63 = arith.constant 0 : index
    %499 = memref.load %arg5[%c0_63] : memref<1xf32, #tpu.memory_space<smem>>
    %500 = vector.broadcast %499 : f32 to vector<2x256xf32>
    %501 = arith.addf %498, %500 : vector<2x256xf32>
    %cst_64 = arith.constant 1.000000e-01 : f32
    %cst_65 = arith.constant 3.000000e-01 : f32
    %502 = vector.broadcast %cst_64 : f32 to vector<2x256xf32>
    %503 = arith.maximumf %502, %501 : vector<2x256xf32>
    %504 = vector.broadcast %cst_65 : f32 to vector<2x256xf32>
    %505 = arith.minimumf %504, %503 : vector<2x256xf32>
    %506 = arith.mulf %505, %505 : vector<2x256xf32>
    %507 = math.absf %11 : vector<2x256xf32>
    %508 = arith.mulf %506, %507 : vector<2x256xf32>
    %509 = arith.mulf %508, %11 : vector<2x256xf32>
    %c255_i32_66 = arith.constant 255 : i32
    %510 = tpu.dynamic_rotate %509 by %c255_i32_66 dim 1 : vector<2x256xf32>, i32 -> vector<2x256xf32>
    %c1_i32_67 = arith.constant 1 : i32
    %511 = tpu.dynamic_rotate %509 by %c1_i32_67 dim 1 : vector<2x256xf32>, i32 -> vector<2x256xf32>
    %512 = arith.subf %510, %511 : vector<2x256xf32>
    %cst_68 = arith.constant 3.77123618 : f32
    %513 = vector.broadcast %cst_68 : f32 to vector<2x256xf32>
    %514 = arith.mulf %512, %513 : vector<2x256xf32>
    %c254_i32_69 = arith.constant 254 : i32
    %515 = tpu.dynamic_rotate %509 by %c254_i32_69 dim 1 : vector<2x256xf32>, i32 -> vector<2x256xf32>
    %c2_i32_70 = arith.constant 2 : i32
    %516 = tpu.dynamic_rotate %509 by %c2_i32_70 dim 1 : vector<2x256xf32>, i32 -> vector<2x256xf32>
    %517 = arith.subf %515, %516 : vector<2x256xf32>
    %cst_71 = arith.constant -0.471404523 : f32
    %518 = vector.broadcast %cst_71 : f32 to vector<2x256xf32>
    %519 = arith.mulf %517, %518 : vector<2x256xf32>
    %520 = arith.addf %514, %519 : vector<2x256xf32>
    %c0_72 = arith.constant 0 : index
    %c0_73 = arith.constant 0 : index
    %521 = vector.load %arg6[%c0_72, %c0_73] : memref<2x256xf32, #tpu.memory_space<vmem>>, vector<2x256xf32>
    tpu.vector_store %arg6[%c0_72, %c0_73], %520 {strides = array<i32>} : memref<2x256xf32, #tpu.memory_space<vmem>>, vector<2x256xf32>,
    return
  }
  func.func @transform_0(%arg0: i32) -> (i32, i32) {
    %c0_i32 = arith.constant 0 : i32
    %c0_i32_0 = arith.constant 0 : i32
    return %arg0, %c0_i32 : i32, i32
  }
  func.func @transform_1(%arg0: i32) -> i32 {
    %c0_i32 = arith.constant 0 : i32
    %c0_i32_0 = arith.constant 0 : i32
    return %c0_i32 : i32
  }
  func.func @transform_2(%arg0: i32) -> i32 {
    %c0_i32 = arith.constant 0 : i32
    %c0_i32_0 = arith.constant 0 : i32
    return %c0_i32 : i32
  }
  func.func @transform_3(%arg0: i32) -> i32 {
    %c0_i32 = arith.constant 0 : i32
    %c0_i32_0 = arith.constant 0 : i32
    return %c0_i32 : i32
  }
  func.func @transform_4(%arg0: i32) -> i32 {
    %c0_i32 = arith.constant 0 : i32
    %c0_i32_0 = arith.constant 0 : i32
    return %c0_i32 : i32
  }
  func.func @transform_5(%arg0: i32) -> (i32, i32) {
    %c0_i32 = arith.constant 0 : i32
    %c0_i32_0 = arith.constant 0 : i32
    return %arg0, %c0_i32 : i32, i32
  }
}

</mosaic_0001>

<llo_original>
// kernel: tpu_custom_call.1
$region0: #{tpu_custom_call.1}
  #allocation0 [shape = 'u32[]', space=smem, size = 0x4, offset = 0x4, fixed_abs, tag = 'smem constant byte address 0x4 - core index']
  #allocation1 [shape = 'u32[72,128]{1,0:T(1,128)}', space=vmem, size = 0x9000, scoped, tag = 'internal scratch']
  #allocation2 [shape = 'f32[1]{0:T(128)S(6)}', space=smem, size = 0x200, scoped, tag = 'scoped memory for tpu_custom_call.1']
  %s0 = inlined_call_operand.hbm [shape: f32[2,256], index: 0, kind: input, shape index: {}]
  %s1 = inlined_call_operand.vmem [shape: f32[72], index: 1, kind: input, shape index: {}]
  %s2 = inlined_call_operand.vmem [shape: f32[8], index: 2, kind: input, shape index: {}]
  %s3 = inlined_call_operand.vmem [shape: f32[40], index: 3, kind: input, shape index: {}]
  %s4 = inlined_call_operand.<no memory space> [shape: f32[1], index: 4, kind: input, shape index: {}]
  %s5 = inlined_call_operand.hbm [shape: f32[2,256], index: 5, kind: output, shape index: {}]
  %s6 = sld [smem:[#allocation0]]
  $region46: #{tpu_custom_call.1} parent=0
    _
  %s8 = ssub.s32 1, %s6
  %s9 = scalar_select 0, %s8, %s6
  %10 = sst [smem:[#allocation2]] %s4
  $region1: #{tpu_custom_call.1} parent=0
    #allocation3 [shape = 'u8[2048]{0}', space=vmem, size = 0x800, scoped, tag = 'input window, operand 0, single buffered']
    #allocation4 [shape = 's32[1]{0}', space=sflag, size = 0x4, scoped, tag = 'scoped memory for tpu_custom_call.1']
    #allocation5 [shape = 's32[1]{0}', space=sflag, size = 0x4, scoped, tag = 'scoped memory for tpu_custom_call.1']
    #allocation6 [shape = 's32[1]{0}', space=sflag, size = 0x4, scoped, tag = 'scoped memory for tpu_custom_call.1']
    #allocation7 [shape = 'u8[512]{0}', space=smem, size = 0x200, scoped, tag = 'input window, operand 1, single buffered']
    #allocation8 [shape = 'u8[512]{0}', space=smem, size = 0x200, scoped, tag = 'input window, operand 2, single buffered']
    #allocation9 [shape = 's32[1]{0}', space=sflag, size = 0x4, scoped, tag = 'scoped memory for tpu_custom_call.1']
    #allocation10 [shape = 'u8[512]{0}', space=smem, size = 0x200, scoped, tag = 'input window, operand 3, single buffered']
    #allocation11 [shape = 'u8[2048]{0}', space=vmem, size = 0x800, scoped, tag = 'output window, operand 0, single buffered']
    %11 = vsyncpa [#allocation4], 0
    %12 = vsyncpa [#allocation6], 0
    %13 = vsyncpa [#allocation9], 0
    %14 = vsyncpa [#allocation5], 0
    // Predicated region
    $region2: #{tpu_custom_call.1} parent=1 // pred_check
      _
    $region3: #{tpu_custom_call.1} parent=1 // pred_check_branch
      %16 = sbr.rel (0) target = $region5
    $region4: #{tpu_custom_call.1} parent=1 // pred_region
      %18 = vsyncadd [#allocation4], 0
      %s20 = sshll.u32 %s0, 4
      %s21 = int_to_ptr.hbm [resolvable:$true] %s20
      %s22 = sshll.u32 [#allocation3], 4
      %s23 = int_to_ptr.vmem [resolvable:$true] %s22
      %25 = dma.hbm_to_vmem [thread:$0]  %s21, 64, %s23, [#allocation4]
    $region5: #{tpu_custom_call.1} parent=1 // pred_fallthru
      _
    // Predicated region
    $region6: #{tpu_custom_call.1} parent=1 // pred_check
      _
    $region7: #{tpu_custom_call.1} parent=1 // pred_check_branch
      %27 = sbr.rel (0) target = $region9
    $region8: #{tpu_custom_call.1} parent=1 // pred_region
      %29 = vsyncadd [#allocation6], 0
      %s31 = sshll.u32 %s1, 4
      %s32 = int_to_ptr.vmem [resolvable:$true] %s31
      %34 = dma.vmem_to_smem %s32, 16, [#allocation7], [#allocation6]
    $region9: #{tpu_custom_call.1} parent=1 // pred_fallthru
      _
    // Predicated region
    $region10: #{tpu_custom_call.1} parent=1 // pred_check
      _
    $region11: #{tpu_custom_call.1} parent=1 // pred_check_branch
      %36 = sbr.rel (0) target = $region13
    $region12: #{tpu_custom_call.1} parent=1 // pred_region
      %38 = vsyncadd [#allocation9], 0
      %s40 = sshll.u32 %s2, 4
      %s41 = int_to_ptr.vmem [resolvable:$true] %s40
      %43 = dma.vmem_to_smem %s41, 16, [#allocation8], [#allocation9]
    $region13: #{tpu_custom_call.1} parent=1 // pred_fallthru
      _
    // Predicated region
    $region14: #{tpu_custom_call.1} parent=1 // pred_check
      _
    $region15: #{tpu_custom_call.1} parent=1 // pred_check_branch
      %45 = sbr.rel (0) target = $region17
    $region16: #{tpu_custom_call.1} parent=1 // pred_region
      %47 = vsyncadd [#allocation9], 0
      %s49 = sshll.u32 %s3, 4
      %s50 = int_to_ptr.vmem [resolvable:$true] %s49
      %52 = dma.vmem_to_smem %s50, 16, [#allocation10], [#allocation9]
    $region17: #{tpu_custom_call.1} parent=1 // pred_fallthru
      _
    // Predicated region
    $region18: #{tpu_custom_call.1} parent=1 // pred_check
      _
    $region19: #{tpu_custom_call.1} parent=1 // pred_check_branch
      %54 = sbr.rel (0) target = $region21
    $region20: #{tpu_custom_call.1} parent=1 // pred_region
      _
    $region21: #{tpu_custom_call.1} parent=1 // pred_fallthru
      _
    // Predicated region
    $region22: #{tpu_custom_call.1} parent=1 // pred_check
      _
    $region23: #{tpu_custom_call.1} parent=1 // pred_check_branch
      %56 = sbr.rel (0) target = $region25
    $region24: #{tpu_custom_call.1} parent=1 // pred_region
      %58 = dma.done [#allocation4], 64
    $region25: #{tpu_custom_call.1} parent=1 // pred_fallthru
      _
    // Predicated region
    $region26: #{tpu_custom_call.1} parent=1 // pred_check
      _
    $region27: #{tpu_custom_call.1} parent=1 // pred_check_branch
      %60 = sbr.rel (0) target = $region29
    $region28: #{tpu_custom_call.1} parent=1 // pred_region
      %62 = dma.done [#allocation6], 16
    $region29: #{tpu_custom_call.1} parent=1 // pred_fallthru
      _
    // Predicated region
    $region30: #{tpu_custom_call.1} parent=1 // pred_check
      _
    $region31: #{tpu_custom_call.1} parent=1 // pred_check_branch
      %64 = sbr.rel (0) target = $region33
    $region32: #{tpu_custom_call.1} parent=1 // pred_region
      %66 = dma.done [#allocation9], 16
    $region33: #{tpu_custom_call.1} parent=1 // pred_fallthru
      _
    // Predicated region
    $region34: #{tpu_custom_call.1} parent=1 // pred_check
      _
    $region35: #{tpu_custom_call.1} parent=1 // pred_check_branch
      %68 = sbr.rel (0) target = $region37
    $region36: #{tpu_custom_call.1} parent=1 // pred_region
      %70 = dma.done [#allocation9], 16
    $region37: #{tpu_custom_call.1} parent=1 // pred_fallthru
      _
    %71 = sfence
    %v72 = vld [vmem:[#allocation3] sm:$0xf]
    %74 = vst [vmem:[#allocation1] ss:$4 sm:$0xff] %v72
    %v75 = vld.sshfl [vmem:[#allocation1] sm:$0xff pattern:$0x73625140]
    %v76 = vld.sshfl [vmem:[#allocation1 + $0x8] sm:$0xff pattern:$0x73625140]
    %79 = vrot.lane.b32.xlu0 %v75, 127
    %v80 = vpop.permute.xlu0 %79
    %81 = vrot.lane.b32.xlu0 %v76, 127
    %v82 = vpop.permute.xlu0 %81
    %v83 = vlaneseq
    %v84 = vand.u32 %v83, 127
    %vm85 = vcmp.lt.s32.totalorder %v84, 127
    %v86 = vsel %vm85, %v80, %v82
    %v87 = vsel %vm85, %v82, %v80
    %88 = vst [vmem:[#allocation1] ss:$4 sm:$0xff] %v72
    %v89 = vld.sshfl [vmem:[#allocation1] sm:$0xff pattern:$0x73625140]
    %v90 = vld.sshfl [vmem:[#allocation1 + $0x8] sm:$0xff pattern:$0x73625140]
    %93 = vrot.lane.b32.xlu0 %v89, 1
    %v94 = vpop.permute.xlu0 %93
    %95 = vrot.lane.b32.xlu0 %v90, 1
    %v96 = vpop.permute.xlu0 %95
    %vm97 = vcmp.lt.s32.totalorder %v84, 1
    %v98 = vsel %vm97, %v94, %v96
    %v99 = vsel %vm97, %v96, %v94
    %v100 = vsub.f32 %v86, %v99
    %v101 = vsub.f32 %v87, %v98
    %v102 = vmul.f32 %v100, 0.6666667
    %v103 = vmul.f32 %v101, 0.6666667
    %104 = vst [vmem:[#allocation1] ss:$4 sm:$0xff] %v72
    %v105 = vld.sshfl [vmem:[#allocation1] sm:$0xff pattern:$0x73625140]
    %v106 = vld.sshfl [vmem:[#allocation1 + $0x8] sm:$0xff pattern:$0x73625140]
    %109 = vrot.lane.b32.xlu0 %v105, 126
    %v110 = vpop.permute.xlu0 %109
    %111 = vrot.lane.b32.xlu0 %v106, 126
    %v112 = vpop.permute.xlu0 %111
    %vm113 = vcmp.lt.s32.totalorder %v84, 126
    %v114 = vsel %vm113, %v110, %v112
    %v115 = vsel %vm113, %v112, %v110
    %116 = vst [vmem:[#allocation1] ss:$4 sm:$0xff] %v72
    %v117 = vld.sshfl [vmem:[#allocation1] sm:$0xff pattern:$0x73625140]
    %v118 = vld.sshfl [vmem:[#allocation1 + $0x8] sm:$0xff pattern:$0x73625140]
    %121 = vrot.lane.b32.xlu0 %v117, 2
    %v122 = vpop.permute.xlu0 %121
    %123 = vrot.lane.b32.xlu0 %v118, 2
    %v124 = vpop.permute.xlu0 %123
    %vm125 = vcmp.lt.s32.totalorder %v84, 2
    %v126 = vsel %vm125, %v122, %v124
    %v127 = vsel %vm125, %v124, %v122
    %v128 = vsub.f32 %v114, %v127
    %v129 = vsub.f32 %v115, %v126
    %v130 = vmul.f32 %v128, -0.083333336
    %v131 = vmul.f32 %v129, -0.083333336
    %v132 = vadd.f32 %v102, %v130
    %v133 = vadd.f32 %v103, %v131
    %134 = vst [vmem:[#allocation1] ss:$4 sm:$0xff] %v72
    %v135 = vld.sshfl [vmem:[#allocation1] sm:$0xff pattern:$0x73625140]
    %v136 = vld.sshfl [vmem:[#allocation1 + $0x8] sm:$0xff pattern:$0x73625140]
    %139 = vrot.lane.b32.xlu0 %v135, 4
    %v140 = vpop.permute.xlu0 %139
    %141 = vrot.lane.b32.xlu0 %v136, 4
    %v142 = vpop.permute.xlu0 %141
    %vm143 = vcmp.lt.s32.totalorder %v84, 4
    %v144 = vsel %vm143, %v140, %v142
    %v145 = vsel %vm143, %v142, %v140
    %146 = vst [vmem:[#allocation1] ss:$4 sm:$0xff] %v72
    %v147 = vld.sshfl [vmem:[#allocation1] sm:$0xff pattern:$0x73625140]
    %v148 = vld.sshfl [vmem:[#allocation1 + $0x8] sm:$0xff pattern:$0x73625140]
    %151 = vrot.lane.b32.xlu0 %v147, 3
    %v152 = vpop.permute.xlu0 %151
    %153 = vrot.lane.b32.xlu0 %v148, 3
    %v154 = vpop.permute.xlu0 %153
    %vm155 = vcmp.lt.s32.totalorder %v84, 3
    %v156 = vsel %vm155, %v152, %v154
    %v157 = vsel %vm155, %v154, %v152
    %158 = vst [vmem:[#allocation1] ss:$4 sm:$0xff] %v72
    %v159 = vld.sshfl [vmem:[#allocation1] sm:$0xff pattern:$0x73625140]
    %v160 = vld.sshfl [vmem:[#allocation1 + $0x8] sm:$0xff pattern:$0x73625140]
    %163 = vrot.lane.b32.xlu0 %v159, 125
    %v164 = vpop.permute.xlu0 %163
    %165 = vrot.lane.b32.xlu0 %v160, 125
    %v166 = vpop.permute.xlu0 %165
    %vm167 = vcmp.lt.s32.totalorder %v84, 125
    %v168 = vsel %vm167, %v164, %v166
    %v169 = vsel %vm167, %v166, %v164
    %170 = vst [vmem:[#allocation1] ss:$4 sm:$0xff] %v72
    %v171 = vld.sshfl [vmem:[#allocation1] sm:$0xff pattern:$0x73625140]
    %v172 = vld.sshfl [vmem:[#allocation1 + $0x8] sm:$0xff pattern:$0x73625140]
    %175 = vrot.lane.b32.xlu0 %v171, 124
    %v176 = vpop.permute.xlu0 %175
    %177 = vrot.lane.b32.xlu0 %v172, 124
    %v178 = vpop.permute.xlu0 %177
    %vm179 = vcmp.lt.s32.totalorder %v84, 124
    %v180 = vsel %vm179, %v176, %v178
    %v181 = vsel %vm179, %v178, %v176
    %s182 = sld [smem:[#allocation7]]
    %v183 = vstv %s182
    %v184 = vmul.f32 %v183, %v145
    %v185 = vmul.f32 %v183, %v144
    %s186 = sld [smem:[#allocation7 + $0x1]]
    %v187 = vstv %s186
    %v188 = vmul.f32 %v187, %v157
    %v189 = vmul.f32 %v187, %v156
    %v190 = vadd.f32 %v184, %v188
    %v191 = vadd.f32 %v185, %v189
    %s192 = sld [smem:[#allocation7 + $0x2]]
    %v193 = vstv %s192
    %v194 = vmul.f32 %v193, %v127
    %v195 = vmul.f32 %v193, %v126
    %v196 = vadd.f32 %v190, %v194
    %v197 = vadd.f32 %v191, %v195
    %s198 = sld [smem:[#allocation7 + $0x3]]
    %v199 = vstv %s198
    %v200 = vmul.f32 %v199, %v99
    %v201 = vmul.f32 %v199, %v98
    %v202 = vadd.f32 %v196, %v200
    %v203 = vadd.f32 %v197, %v201
    %s204 = sld [smem:[#allocation7 + $0x4]]
    %v205 = vstv %s204
    %v206 = vmul.f32 %v205, %v72
    %208 = vst [vmem:[#allocation1] ss:$4 sm:$0xff] %v206
    %v209 = vld.sshfl [vmem:[#allocation1] sm:$0xff pattern:$0x73625140]
    %v210 = vld.sshfl [vmem:[#allocation1 + $0x8] sm:$0xff pattern:$0x73625140]
    %v213 = vadd.f32 %v202, %v209
    %v214 = vadd.f32 %v203, %v210
    %s215 = sld [smem:[#allocation7 + $0x5]]
    %v216 = vstv %s215
    %v217 = vmul.f32 %v216, %v86
    %v218 = vmul.f32 %v216, %v87
    %v219 = vadd.f32 %v213, %v217
    %v220 = vadd.f32 %v214, %v218
    %s221 = sld [smem:[#allocation7 + $0x6]]
    %v222 = vstv %s221
    %v223 = vmul.f32 %v222, %v114
    %v224 = vmul.f32 %v222, %v115
    %v225 = vadd.f32 %v219, %v223
    %v226 = vadd.f32 %v220, %v224
    %s227 = sld [smem:[#allocation7 + $0x7]]
    %v228 = vstv %s227
    %v229 = vmul.f32 %v228, %v168
    %v230 = vmul.f32 %v228, %v169
    %v231 = vadd.f32 %v225, %v229
    %v232 = vadd.f32 %v226, %v230
    %s233 = sld [smem:[#allocation7 + $0x8]]
    %v234 = vstv %s233
    %v235 = vmul.f32 %v234, %v180
    %v236 = vmul.f32 %v234, %v181
    %v237 = vadd.f32 %v231, %v235
    %v238 = vadd.f32 %v232, %v236
    %s239 = sld [smem:[#allocation8]]
    %v240 = vstv %s239
    %v241 = vadd.f32 %v237, %v240
    %v242 = vadd.f32 %v238, %v240
    %v243 = vmax.f32 %v241, 0.0
    %v244 = vmax.f32 %v242, 0.0
    %s245 = sld [smem:[#allocation7 + $0x9]]
    %v246 = vstv %s245
    %v247 = vmul.f32 %v246, %v145
    %v248 = vmul.f32 %v246, %v144
    %s249 = sld [smem:[#allocation7 + $0xa]]
    %v250 = vstv %s249
    %v251 = vmul.f32 %v250, %v157
    %v252 = vmul.f32 %v250, %v156
    %v253 = vadd.f32 %v247, %v251
    %v254 = vadd.f32 %v248, %v252
    %s255 = sld [smem:[#allocation7 + $0xb]]
    %v256 = vstv %s255
    %v257 = vmul.f32 %v256, %v127
    %v258 = vmul.f32 %v256, %v126
    %v259 = vadd.f32 %v253, %v257
    %v260 = vadd.f32 %v254, %v258
    %s261 = sld [smem:[#allocation7 + $0xc]]
    %v262 = vstv %s261
    %v263 = vmul.f32 %v262, %v99
    %v264 = vmul.f32 %v262, %v98
    %v265 = vadd.f32 %v259, %v263
    %v266 = vadd.f32 %v260, %v264
    %s267 = sld [smem:[#allocation7 + $0xd]]
    %v268 = vstv %s267
    %v269 = vmul.f32 %v268, %v72
    %271 = vst [vmem:[#allocation1] ss:$4 sm:$0xff] %v269
    %v272 = vld.sshfl [vmem:[#allocation1] sm:$0xff pattern:$0x73625140]
    %v273 = vld.sshfl [vmem:[#allocation1 + $0x8] sm:$0xff pattern:$0x73625140]
    %v276 = vadd.f32 %v265, %v272
    %v277 = vadd.f32 %v266, %v273
    %s278 = sld [smem:[#allocation7 + $0xe]]
    %v279 = vstv %s278
    %v280 = vmul.f32 %v279, %v86
    %v281 = vmul.f32 %v279, %v87
    %v282 = vadd.f32 %v276, %v280
    %v283 = vadd.f32 %v277, %v281
    %s284 = sld [smem:[#allocation7 + $0xf]]
    %v285 = vstv %s284
    %v286 = vmul.f32 %v285, %v114
    %v287 = vmul.f32 %v285, %v115
    %v288 = vadd.f32 %v282, %v286
    %v289 = vadd.f32 %v283, %v287
    %s290 = sld [smem:[#allocation7 + $0x10]]
    %v291 = vstv %s290
    %v292 = vmul.f32 %v291, %v168
    %v293 = vmul.f32 %v291, %v169
    %v294 = vadd.f32 %v288, %v292
    %v295 = vadd.f32 %v289, %v293
    %s296 = sld [smem:[#allocation7 + $0x11]]
    %v297 = vstv %s296
    %v298 = vmul.f32 %v297, %v180
    %v299 = vmul.f32 %v297, %v181
    %v300 = vadd.f32 %v294, %v298
    %v301 = vadd.f32 %v295, %v299
    %s302 = sld [smem:[#allocation8 + $0x1]]
    %v303 = vstv %s302
    %v304 = vadd.f32 %v300, %v303
    %v305 = vadd.f32 %v301, %v303
    %v306 = vmax.f32 %v304, 0.0
    %v307 = vmax.f32 %v305, 0.0
    %s308 = sld [smem:[#allocation7 + $0x12]]
    %v309 = vstv %s308
    %v310 = vmul.f32 %v309, %v145
    %v311 = vmul.f32 %v309, %v144
    %s312 = sld [smem:[#allocation7 + $0x13]]
    %v313 = vstv %s312
    %v314 = vmul.f32 %v313, %v157
    %v315 = vmul.f32 %v313, %v156
    %v316 = vadd.f32 %v310, %v314
    %v317 = vadd.f32 %v311, %v315
    %s318 = sld [smem:[#allocation7 + $0x14]]
    %v319 = vstv %s318
    %v320 = vmul.f32 %v319, %v127
    %v321 = vmul.f32 %v319, %v126
    %v322 = vadd.f32 %v316, %v320
    %v323 = vadd.f32 %v317, %v321
    %s324 = sld [smem:[#allocation7 + $0x15]]
    %v325 = vstv %s324
    %v326 = vmul.f32 %v325, %v99
    %v327 = vmul.f32 %v325, %v98
    %v328 = vadd.f32 %v322, %v326
    %v329 = vadd.f32 %v323, %v327
    %s330 = sld [smem:[#allocation7 + $0x16]]
    %v331 = vstv %s330
    %v332 = vmul.f32 %v331, %v72
    %334 = vst [vmem:[#allocation1] ss:$4 sm:$0xff] %v332
    %v335 = vld.sshfl [vmem:[#allocation1] sm:$0xff pattern:$0x73625140]
    %v336 = vld.sshfl [vmem:[#allocation1 + $0x8] sm:$0xff pattern:$0x73625140]
    %v339 = vadd.f32 %v328, %v335
    %v340 = vadd.f32 %v329, %v336
    %s341 = sld [smem:[#allocation7 + $0x17]]
    %v342 = vstv %s341
    %v343 = vmul.f32 %v342, %v86
    %v344 = vmul.f32 %v342, %v87
    %v345 = vadd.f32 %v339, %v343
    %v346 = vadd.f32 %v340, %v344
    %s347 = sld [smem:[#allocation7 + $0x18]]
    %v348 = vstv %s347
    %v349 = vmul.f32 %v348, %v114
    %v350 = vmul.f32 %v348, %v115
    %v351 = vadd.f32 %v345, %v349
    %v352 = vadd.f32 %v346, %v350
    %s353 = sld [smem:[#allocation7 + $0x19]]
    %v354 = vstv %s353
    %v355 = vmul.f32 %v354, %v168
    %v356 = vmul.f32 %v354, %v169
    %v357 = vadd.f32 %v351, %v355
    %v358 = vadd.f32 %v352, %v356
    %s359 = sld [smem:[#allocation7 + $0x1a]]
    %v360 = vstv %s359
    %v361 = vmul.f32 %v360, %v180
    %v362 = vmul.f32 %v360, %v181
    %v363 = vadd.f32 %v357, %v361
    %v364 = vadd.f32 %v358, %v362
    %s365 = sld [smem:[#allocation8 + $0x2]]
    %v366 = vstv %s365
    %v367 = vadd.f32 %v363, %v366
    %v368 = vadd.f32 %v364, %v366
    %v369 = vmax.f32 %v367, 0.0
    %v370 = vmax.f32 %v368, 0.0
    %s371 = sld [smem:[#allocation7 + $0x1b]]
    %v372 = vstv %s371
    %v373 = vmul.f32 %v372, %v145
    %v374 = vmul.f32 %v372, %v144
    %s375 = sld [smem:[#allocation7 + $0x1c]]
    %v376 = vstv %s375
    %v377 = vmul.f32 %v376, %v157
    %v378 = vmul.f32 %v376, %v156
    %v379 = vadd.f32 %v373, %v377
    %v380 = vadd.f32 %v374, %v378
    %s381 = sld [smem:[#allocation7 + $0x1d]]
    %v382 = vstv %s381
    %v383 = vmul.f32 %v382, %v127
    %v384 = vmul.f32 %v382, %v126
    %v385 = vadd.f32 %v379, %v383
    %v386 = vadd.f32 %v380, %v384
    %s387 = sld [smem:[#allocation7 + $0x1e]]
    %v388 = vstv %s387
    %v389 = vmul.f32 %v388, %v99
    %v390 = vmul.f32 %v388, %v98
    %v391 = vadd.f32 %v385, %v389
    %v392 = vadd.f32 %v386, %v390
    %s393 = sld [smem:[#allocation7 + $0x1f]]
    %v394 = vstv %s393
    %v395 = vmul.f32 %v394, %v72
    %397 = vst [vmem:[#allocation1] ss:$4 sm:$0xff] %v395
    %v398 = vld.sshfl [vmem:[#allocation1] sm:$0xff pattern:$0x73625140]
    %v399 = vld.sshfl [vmem:[#allocation1 + $0x8] sm:$0xff pattern:$0x73625140]
    %v402 = vadd.f32 %v391, %v398
    %v403 = vadd.f32 %v392, %v399
    %s404 = sld [smem:[#allocation7 + $0x20]]
    %v405 = vstv %s404
    %v406 = vmul.f32 %v405, %v86
    %v407 = vmul.f32 %v405, %v87
    %v408 = vadd.f32 %v402, %v406
    %v409 = vadd.f32 %v403, %v407
    %s410 = sld [smem:[#allocation7 + $0x21]]
    %v411 = vstv %s410
    %v412 = vmul.f32 %v411, %v114
    %v413 = vmul.f32 %v411, %v115
    %v414 = vadd.f32 %v408, %v412
    %v415 = vadd.f32 %v409, %v413
    %s416 = sld [smem:[#allocation7 + $0x22]]
    %v417 = vstv %s416
    %v418 = vmul.f32 %v417, %v168
    %v419 = vmul.f32 %v417, %v169
    %v420 = vadd.f32 %v414, %v418
    %v421 = vadd.f32 %v415, %v419
    %s422 = sld [smem:[#allocation7 + $0x23]]
    %v423 = vstv %s422
    %v424 = vmul.f32 %v423, %v180
    %v425 = vmul.f32 %v423, %v181
    %v426 = vadd.f32 %v420, %v424
    %v427 = vadd.f32 %v421, %v425
    %s428 = sld [smem:[#allocation8 + $0x3]]
    %v429 = vstv %s428
    %v430 = vadd.f32 %v426, %v429
    %v431 = vadd.f32 %v427, %v429
    %v432 = vmax.f32 %v430, 0.0
    %v433 = vmax.f32 %v431, 0.0
    %s434 = sld [smem:[#allocation7 + $0x24]]
    %v435 = vstv %s434
    %v436 = vmul.f32 %v435, %v145
    %v437 = vmul.f32 %v435, %v144
    %s438 = sld [smem:[#allocation7 + $0x25]]
    %v439 = vstv %s438
    %v440 = vmul.f32 %v439, %v157
    %v441 = vmul.f32 %v439, %v156
    %v442 = vadd.f32 %v436, %v440
    %v443 = vadd.f32 %v437, %v441
    %s444 = sld [smem:[#allocation7 + $0x26]]
    %v445 = vstv %s444
    %v446 = vmul.f32 %v445, %v127
    %v447 = vmul.f32 %v445, %v126
    %v448 = vadd.f32 %v442, %v446
    %v449 = vadd.f32 %v443, %v447
    %s450 = sld [smem:[#allocation7 + $0x27]]
    %v451 = vstv %s450
    %v452 = vmul.f32 %v451, %v99
    %v453 = vmul.f32 %v451, %v98
    %v454 = vadd.f32 %v448, %v452
    %v455 = vadd.f32 %v449, %v453
    %s456 = sld [smem:[#allocation7 + $0x28]]
    %v457 = vstv %s456
    %v458 = vmul.f32 %v457, %v72
    %460 = vst [vmem:[#allocation1] ss:$4 sm:$0xff] %v458
    %v461 = vld.sshfl [vmem:[#allocation1] sm:$0xff pattern:$0x73625140]
    %v462 = vld.sshfl [vmem:[#allocation1 + $0x8] sm:$0xff pattern:$0x73625140]
    %v465 = vadd.f32 %v454, %v461
    %v466 = vadd.f32 %v455, %v462
    %s467 = sld [smem:[#allocation7 + $0x29]]
    %v468 = vstv %s467
    %v469 = vmul.f32 %v468, %v86
    %v470 = vmul.f32 %v468, %v87
    %v471 = vadd.f32 %v465, %v469
    %v472 = vadd.f32 %v466, %v470
    %s473 = sld [smem:[#allocation7 + $0x2a]]
    %v474 = vstv %s473
    %v475 = vmul.f32 %v474, %v114
    %v476 = vmul.f32 %v474, %v115
    %v477 = vadd.f32 %v471, %v475
    %v478 = vadd.f32 %v472, %v476
    %s479 = sld [smem:[#allocation7 + $0x2b]]
    %v480 = vstv %s479
    %v481 = vmul.f32 %v480, %v168
    %v482 = vmul.f32 %v480, %v169
    %v483 = vadd.f32 %v477, %v481
    %v484 = vadd.f32 %v478, %v482
    %s485 = sld [smem:[#allocation7 + $0x2c]]
    %v486 = vstv %s485
    %v487 = vmul.f32 %v486, %v180
    %v488 = vmul.f32 %v486, %v181
    %v489 = vadd.f32 %v483, %v487
    %v490 = vadd.f32 %v484, %v488
    %s491 = sld [smem:[#allocation8 + $0x4]]
    %v492 = vstv %s491
    %v493 = vadd.f32 %v489, %v492
    %v494 = vadd.f32 %v490, %v492
    %v495 = vmax.f32 %v493, 0.0
    %v496 = vmax.f32 %v494, 0.0
    %s497 = sld [smem:[#allocation7 + $0x2d]]
    %v498 = vstv %s497
    %v499 = vmul.f32 %v498, %v145
    %v500 = vmul.f32 %v498, %v144
    %s501 = sld [smem:[#allocation7 + $0x2e]]
    %v502 = vstv %s501
    %v503 = vmul.f32 %v502, %v157
    %v504 = vmul.f32 %v502, %v156
    %v505 = vadd.f32 %v499, %v503
    %v506 = vadd.f32 %v500, %v504
    %s507 = sld [smem:[#allocation7 + $0x2f]]
    %v508 = vstv %s507
    %v509 = vmul.f32 %v508, %v127
    %v510 = vmul.f32 %v508, %v126
    %v511 = vadd.f32 %v505, %v509
    %v512 = vadd.f32 %v506, %v510
    %s513 = sld [smem:[#allocation7 + $0x30]]
    %v514 = vstv %s513
    %v515 = vmul.f32 %v514, %v99
    %v516 = vmul.f32 %v514, %v98
    %v517 = vadd.f32 %v511, %v515
    %v518 = vadd.f32 %v512, %v516
    %s519 = sld [smem:[#allocation7 + $0x31]]
    %v520 = vstv %s519
    %v521 = vmul.f32 %v520, %v72
    %523 = vst [vmem:[#allocation1] ss:$4 sm:$0xff] %v521
    %v524 = vld.sshfl [vmem:[#allocation1] sm:$0xff pattern:$0x73625140]
    %v525 = vld.sshfl [vmem:[#allocation1 + $0x8] sm:$0xff pattern:$0x73625140]
    %v528 = vadd.f32 %v517, %v524
    %v529 = vadd.f32 %v518, %v525
    %s530 = sld [smem:[#allocation7 + $0x32]]
    %v531 = vstv %s530
    %v532 = vmul.f32 %v531, %v86
    %v533 = vmul.f32 %v531, %v87
    %v534 = vadd.f32 %v528, %v532
    %v535 = vadd.f32 %v529, %v533
    %s536 = sld [smem:[#allocation7 + $0x33]]
    %v537 = vstv %s536
    %v538 = vmul.f32 %v537, %v114
    %v539 = vmul.f32 %v537, %v115
    %v540 = vadd.f32 %v534, %v538
    %v541 = vadd.f32 %v535, %v539
    %s542 = sld [smem:[#allocation7 + $0x34]]
    %v543 = vstv %s542
    %v544 = vmul.f32 %v543, %v168
    %v545 = vmul.f32 %v543, %v169
    %v546 = vadd.f32 %v540, %v544
    %v547 = vadd.f32 %v541, %v545
    %s548 = sld [smem:[#allocation7 + $0x35]]
    %v549 = vstv %s548
    %v550 = vmul.f32 %v549, %v180
    %v551 = vmul.f32 %v549, %v181
    %v552 = vadd.f32 %v546, %v550
    %v553 = vadd.f32 %v547, %v551
    %s554 = sld [smem:[#allocation8 + $0x5]]
    %v555 = vstv %s554
    %v556 = vadd.f32 %v552, %v555
    %v557 = vadd.f32 %v553, %v555
    %v558 = vmax.f32 %v556, 0.0
    %v559 = vmax.f32 %v557, 0.0
    %s560 = sld [smem:[#allocation7 + $0x36]]
    %v561 = vstv %s560
    %v562 = vmul.f32 %v561, %v145
    %v563 = vmul.f32 %v561, %v144
    %s564 = sld [smem:[#allocation7 + $0x37]]
    %v565 = vstv %s564
    %v566 = vmul.f32 %v565, %v157
    %v567 = vmul.f32 %v565, %v156
    %v568 = vadd.f32 %v562, %v566
    %v569 = vadd.f32 %v563, %v567
    %s570 = sld [smem:[#allocation7 + $0x38]]
    %v571 = vstv %s570
    %v572 = vmul.f32 %v571, %v127
    %v573 = vmul.f32 %v571, %v126
    %v574 = vadd.f32 %v568, %v572
    %v575 = vadd.f32 %v569, %v573
    %s576 = sld [smem:[#allocation7 + $0x39]]
    %v577 = vstv %s576
    %v578 = vmul.f32 %v577, %v99
    %v579 = vmul.f32 %v577, %v98
    %v580 = vadd.f32 %v574, %v578
    %v581 = vadd.f32 %v575, %v579
    %s582 = sld [smem:[#allocation7 + $0x3a]]
    %v583 = vstv %s582
    %v584 = vmul.f32 %v583, %v72
    %586 = vst [vmem:[#allocation1] ss:$4 sm:$0xff] %v584
    %v587 = vld.sshfl [vmem:[#allocation1] sm:$0xff pattern:$0x73625140]
    %v588 = vld.sshfl [vmem:[#allocation1 + $0x8] sm:$0xff pattern:$0x73625140]
    %v591 = vadd.f32 %v580, %v587
    %v592 = vadd.f32 %v581, %v588
    %s593 = sld [smem:[#allocation7 + $0x3b]]
    %v594 = vstv %s593
    %v595 = vmul.f32 %v594, %v86
    %v596 = vmul.f32 %v594, %v87
    %v597 = vadd.f32 %v591, %v595
    %v598 = vadd.f32 %v592, %v596
    %s599 = sld [smem:[#allocation7 + $0x3c]]
    %v600 = vstv %s599
    %v601 = vmul.f32 %v600, %v114
    %v602 = vmul.f32 %v600, %v115
    %v603 = vadd.f32 %v597, %v601
    %v604 = vadd.f32 %v598, %v602
    %s605 = sld [smem:[#allocation7 + $0x3d]]
    %v606 = vstv %s605
    %v607 = vmul.f32 %v606, %v168
    %v608 = vmul.f32 %v606, %v169
    %v609 = vadd.f32 %v603, %v607
    %v610 = vadd.f32 %v604, %v608
    %s611 = sld [smem:[#allocation7 + $0x3e]]
    %v612 = vstv %s611
    %v613 = vmul.f32 %v612, %v180
    %v614 = vmul.f32 %v612, %v181
    %v615 = vadd.f32 %v609, %v613
    %v616 = vadd.f32 %v610, %v614
    %s617 = sld [smem:[#allocation8 + $0x6]]
    %v618 = vstv %s617
    %v619 = vadd.f32 %v615, %v618
    %v620 = vadd.f32 %v616, %v618
    %v621 = vmax.f32 %v619, 0.0
    %v622 = vmax.f32 %v620, 0.0
    %s623 = sld [smem:[#allocation7 + $0x3f]]
    %v624 = vstv %s623
    %v625 = vmul.f32 %v624, %v145
    %v626 = vmul.f32 %v624, %v144
    %s627 = sld [smem:[#allocation7 + $0x40]]
    %v628 = vstv %s627
    %v629 = vmul.f32 %v628, %v157
    %v630 = vmul.f32 %v628, %v156
    %v631 = vadd.f32 %v625, %v629
    %v632 = vadd.f32 %v626, %v630
    %s633 = sld [smem:[#allocation7 + $0x41]]
    %v634 = vstv %s633
    %v635 = vmul.f32 %v634, %v127
    %v636 = vmul.f32 %v634, %v126
    %v637 = vadd.f32 %v631, %v635
    %v638 = vadd.f32 %v632, %v636
    %s639 = sld [smem:[#allocation7 + $0x42]]
    %v640 = vstv %s639
    %v641 = vmul.f32 %v640, %v99
    %v642 = vmul.f32 %v640, %v98
    %v643 = vadd.f32 %v637, %v641
    %v644 = vadd.f32 %v638, %v642
    %s645 = sld [smem:[#allocation7 + $0x43]]
    %v646 = vstv %s645
    %v647 = vmul.f32 %v646, %v72
    %649 = vst [vmem:[#allocation1] ss:$4 sm:$0xff] %v647
    %v650 = vld.sshfl [vmem:[#allocation1] sm:$0xff pattern:$0x73625140]
    %v651 = vld.sshfl [vmem:[#allocation1 + $0x8] sm:$0xff pattern:$0x73625140]
    %v654 = vadd.f32 %v643, %v650
    %v655 = vadd.f32 %v644, %v651
    %s656 = sld [smem:[#allocation7 + $0x44]]
    %v657 = vstv %s656
    %v658 = vmul.f32 %v657, %v86
    %v659 = vmul.f32 %v657, %v87
    %v660 = vadd.f32 %v654, %v658
    %v661 = vadd.f32 %v655, %v659
    %s662 = sld [smem:[#allocation7 + $0x45]]
    %v663 = vstv %s662
    %v664 = vmul.f32 %v663, %v114
    %v665 = vmul.f32 %v663, %v115
    %v666 = vadd.f32 %v660, %v664
    %v667 = vadd.f32 %v661, %v665
    %s668 = sld [smem:[#allocation7 + $0x46]]
    %v669 = vstv %s668
    %v670 = vmul.f32 %v669, %v168
    %v671 = vmul.f32 %v669, %v169
    %v672 = vadd.f32 %v666, %v670
    %v673 = vadd.f32 %v667, %v671
    %s674 = sld [smem:[#allocation7 + $0x47]]
    %v675 = vstv %s674
    %v676 = vmul.f32 %v675, %v180
    %v677 = vmul.f32 %v675, %v181
    %v678 = vadd.f32 %v672, %v676
    %v679 = vadd.f32 %v673, %v677
    %s680 = sld [smem:[#allocation8 + $0x7]]
    %v681 = vstv %s680
    %v682 = vadd.f32 %v678, %v681
    %v683 = vadd.f32 %v679, %v681
    %v684 = vmax.f32 %v682, 0.0
    %v685 = vmax.f32 %v683, 0.0
    %s686 = sld [smem:[#allocation10]]
    %v687 = vstv %s686
    %v688 = vmul.f32 %v687, %v243
    %v689 = vmul.f32 %v687, %v244
    %s690 = sld [smem:[#allocation10 + $0x1]]
    %v691 = vstv %s690
    %v692 = vmul.f32 %v691, %v306
    %v693 = vmul.f32 %v691, %v307
    %v694 = vadd.f32 %v688, %v692
    %v695 = vadd.f32 %v689, %v693
    %s696 = sld [smem:[#allocation10 + $0x2]]
    %v697 = vstv %s696
    %v698 = vmul.f32 %v697, %v369
    %v699 = vmul.f32 %v697, %v370
    %v700 = vadd.f32 %v694, %v698
    %v701 = vadd.f32 %v695, %v699
    %s702 = sld [smem:[#allocation10 + $0x3]]
    %v703 = vstv %s702
    %v704 = vmul.f32 %v703, %v432
    %v705 = vmul.f32 %v703, %v433
    %v706 = vadd.f32 %v700, %v704
    %v707 = vadd.f32 %v701, %v705
    %s708 = sld [smem:[#allocation10 + $0x4]]
    %v709 = vstv %s708
    %v710 = vmul.f32 %v709, %v495
    %v711 = vmul.f32 %v709, %v496
    %v712 = vadd.f32 %v706, %v710
    %v713 = vadd.f32 %v707, %v711
    %s714 = sld [smem:[#allocation10 + $0x5]]
    %v715 = vstv %s714
    %v716 = vmul.f32 %v715, %v558
    %v717 = vmul.f32 %v715, %v559
    %v718 = vadd.f32 %v712, %v716
    %v719 = vadd.f32 %v713, %v717
    %s720 = sld [smem:[#allocation10 + $0x6]]
    %v721 = vstv %s720
    %v722 = vmul.f32 %v721, %v621
    %v723 = vmul.f32 %v721, %v622
    %v724 = vadd.f32 %v718, %v722
    %v725 = vadd.f32 %v719, %v723
    %s726 = sld [smem:[#allocation10 + $0x7]]
    %v727 = vstv %s726
    %v728 = vmul.f32 %v727, %v684
    %v729 = vmul.f32 %v727, %v685
    %v730 = vadd.f32 %v724, %v728
    %v731 = vadd.f32 %v725, %v729
    %732 = vrot.lane.b32.xlu0 %v730, 2
    %v733 = vpop.permute.xlu0 %732
    %734 = vrot.lane.b32.xlu0 %v731, 2
    %v735 = vpop.permute.xlu0 %734
    %v736 = vsel %vm125, %v733, %v735
    %v737 = vsel %vm125, %v735, %v733
    %s738 = sld [smem:[#allocation10 + $0x8]]
    %v739 = vstv %s738
    %v740 = vmul.f32 %v739, %v243
    %v741 = vmul.f32 %v739, %v244
    %s742 = sld [smem:[#allocation10 + $0x9]]
    %v743 = vstv %s742
    %v744 = vmul.f32 %v743, %v306
    %v745 = vmul.f32 %v743, %v307
    %v746 = vadd.f32 %v740, %v744
    %v747 = vadd.f32 %v741, %v745
    %s748 = sld [smem:[#allocation10 + $0xa]]
    %v749 = vstv %s748
    %v750 = vmul.f32 %v749, %v369
    %v751 = vmul.f32 %v749, %v370
    %v752 = vadd.f32 %v746, %v750
    %v753 = vadd.f32 %v747, %v751
    %s754 = sld [smem:[#allocation10 + $0xb]]
    %v755 = vstv %s754
    %v756 = vmul.f32 %v755, %v432
    %v757 = vmul.f32 %v755, %v433
    %v758 = vadd.f32 %v752, %v756
    %v759 = vadd.f32 %v753, %v757
    %s760 = sld [smem:[#allocation10 + $0xc]]
    %v761 = vstv %s760
    %v762 = vmul.f32 %v761, %v495
    %v763 = vmul.f32 %v761, %v496
    %v764 = vadd.f32 %v758, %v762
    %v765 = vadd.f32 %v759, %v763
    %s766 = sld [smem:[#allocation10 + $0xd]]
    %v767 = vstv %s766
    %v768 = vmul.f32 %v767, %v558
    %v769 = vmul.f32 %v767, %v559
    %v770 = vadd.f32 %v764, %v768
    %v771 = vadd.f32 %v765, %v769
    %s772 = sld [smem:[#allocation10 + $0xe]]
    %v773 = vstv %s772
    %v774 = vmul.f32 %v773, %v621
    %v775 = vmul.f32 %v773, %v622
    %v776 = vadd.f32 %v770, %v774
    %v777 = vadd.f32 %v771, %v775
    %s778 = sld [smem:[#allocation10 + $0xf]]
    %v779 = vstv %s778
    %v780 = vmul.f32 %v779, %v684
    %v781 = vmul.f32 %v779, %v685
    %v782 = vadd.f32 %v776, %v780
    %v783 = vadd.f32 %v777, %v781
    %784 = vrot.lane.b32.xlu0 %v782, 1
    %v785 = vpop.permute.xlu0 %784
    %786 = vrot.lane.b32.xlu0 %v783, 1
    %v787 = vpop.permute.xlu0 %786
    %v788 = vsel %vm97, %v785, %v787
    %v789 = vsel %vm97, %v787, %v785
    %v790 = vadd.f32 %v737, %v789
    %v791 = vadd.f32 %v736, %v788
    %s792 = sld [smem:[#allocation10 + $0x10]]
    %v793 = vstv %s792
    %v794 = vmul.f32 %v793, %v243
    %v795 = vmul.f32 %v793, %v244
    %s796 = sld [smem:[#allocation10 + $0x11]]
    %v797 = vstv %s796
    %v798 = vmul.f32 %v797, %v306
    %v799 = vmul.f32 %v797, %v307
    %v800 = vadd.f32 %v794, %v798
    %v801 = vadd.f32 %v795, %v799
    %s802 = sld [smem:[#allocation10 + $0x12]]
    %v803 = vstv %s802
    %v804 = vmul.f32 %v803, %v369
    %v805 = vmul.f32 %v803, %v370
    %v806 = vadd.f32 %v800, %v804
    %v807 = vadd.f32 %v801, %v805
    %s808 = sld [smem:[#allocation10 + $0x13]]
    %v809 = vstv %s808
    %v810 = vmul.f32 %v809, %v432
    %v811 = vmul.f32 %v809, %v433
    %v812 = vadd.f32 %v806, %v810
    %v813 = vadd.f32 %v807, %v811
    %s814 = sld [smem:[#allocation10 + $0x14]]
    %v815 = vstv %s814
    %v816 = vmul.f32 %v815, %v495
    %v817 = vmul.f32 %v815, %v496
    %v818 = vadd.f32 %v812, %v816
    %v819 = vadd.f32 %v813, %v817
    %s820 = sld [smem:[#allocation10 + $0x15]]
    %v821 = vstv %s820
    %v822 = vmul.f32 %v821, %v558
    %v823 = vmul.f32 %v821, %v559
    %v824 = vadd.f32 %v818, %v822
    %v825 = vadd.f32 %v819, %v823
    %s826 = sld [smem:[#allocation10 + $0x16]]
    %v827 = vstv %s826
    %v828 = vmul.f32 %v827, %v621
    %v829 = vmul.f32 %v827, %v622
    %v830 = vadd.f32 %v824, %v828
    %v831 = vadd.f32 %v825, %v829
    %s832 = sld [smem:[#allocation10 + $0x17]]
    %v833 = vstv %s832
    %v834 = vmul.f32 %v833, %v684
    %v835 = vmul.f32 %v833, %v685
    %v836 = vadd.f32 %v830, %v834
    %v837 = vadd.f32 %v831, %v835
    %v838 = vadd.f32 %v790, %v836
    %v839 = vadd.f32 %v791, %v837
    %s840 = sld [smem:[#allocation10 + $0x18]]
    %v841 = vstv %s840
    %v842 = vmul.f32 %v841, %v243
    %v843 = vmul.f32 %v841, %v244
    %s844 = sld [smem:[#allocation10 + $0x19]]
    %v845 = vstv %s844
    %v846 = vmul.f32 %v845, %v306
    %v847 = vmul.f32 %v845, %v307
    %v848 = vadd.f32 %v842, %v846
    %v849 = vadd.f32 %v843, %v847
    %s850 = sld [smem:[#allocation10 + $0x1a]]
    %v851 = vstv %s850
    %v852 = vmul.f32 %v851, %v369
    %v853 = vmul.f32 %v851, %v370
    %v854 = vadd.f32 %v848, %v852
    %v855 = vadd.f32 %v849, %v853
    %s856 = sld [smem:[#allocation10 + $0x1b]]
    %v857 = vstv %s856
    %v858 = vmul.f32 %v857, %v432
    %v859 = vmul.f32 %v857, %v433
    %v860 = vadd.f32 %v854, %v858
    %v861 = vadd.f32 %v855, %v859
    %s862 = sld [smem:[#allocation10 + $0x1c]]
    %v863 = vstv %s862
    %v864 = vmul.f32 %v863, %v495
    %v865 = vmul.f32 %v863, %v496
    %v866 = vadd.f32 %v860, %v864
    %v867 = vadd.f32 %v861, %v865
    %s868 = sld [smem:[#allocation10 + $0x1d]]
    %v869 = vstv %s868
    %v870 = vmul.f32 %v869, %v558
    %v871 = vmul.f32 %v869, %v559
    %v872 = vadd.f32 %v866, %v870
    %v873 = vadd.f32 %v867, %v871
    %s874 = sld [smem:[#allocation10 + $0x1e]]
    %v875 = vstv %s874
    %v876 = vmul.f32 %v875, %v621
    %v877 = vmul.f32 %v875, %v622
    %v878 = vadd.f32 %v872, %v876
    %v879 = vadd.f32 %v873, %v877
    %s880 = sld [smem:[#allocation10 + $0x1f]]
    %v881 = vstv %s880
    %v882 = vmul.f32 %v881, %v684
    %v883 = vmul.f32 %v881, %v685
    %v884 = vadd.f32 %v878, %v882
    %v885 = vadd.f32 %v879, %v883
    %886 = vrot.lane.b32.xlu0 %v884, 127
    %v887 = vpop.permute.xlu0 %886
    %888 = vrot.lane.b32.xlu0 %v885, 127
    %v889 = vpop.permute.xlu0 %888
    %v890 = vsel %vm85, %v887, %v889
    %v891 = vsel %vm85, %v889, %v887
    %v892 = vadd.f32 %v838, %v890
    %v893 = vadd.f32 %v839, %v891
    %s894 = sld [smem:[#allocation10 + $0x20]]
    %v895 = vstv %s894
    %v896 = vmul.f32 %v895, %v243
    %v897 = vmul.f32 %v895, %v244
    %s898 = sld [smem:[#allocation10 + $0x21]]
    %v899 = vstv %s898
    %v900 = vmul.f32 %v899, %v306
    %v901 = vmul.f32 %v899, %v307
    %v902 = vadd.f32 %v896, %v900
    %v903 = vadd.f32 %v897, %v901
    %s904 = sld [smem:[#allocation10 + $0x22]]
    %v905 = vstv %s904
    %v906 = vmul.f32 %v905, %v369
    %v907 = vmul.f32 %v905, %v370
    %v908 = vadd.f32 %v902, %v906
    %v909 = vadd.f32 %v903, %v907
    %s910 = sld [smem:[#allocation10 + $0x23]]
    %v911 = vstv %s910
    %v912 = vmul.f32 %v911, %v432
    %v913 = vmul.f32 %v911, %v433
    %v914 = vadd.f32 %v908, %v912
    %v915 = vadd.f32 %v909, %v913
    %s916 = sld [smem:[#allocation10 + $0x24]]
    %v917 = vstv %s916
    %v918 = vmul.f32 %v917, %v495
    %v919 = vmul.f32 %v917, %v496
    %v920 = vadd.f32 %v914, %v918
    %v921 = vadd.f32 %v915, %v919
    %s922 = sld [smem:[#allocation10 + $0x25]]
    %v923 = vstv %s922
    %v924 = vmul.f32 %v923, %v558
    %v925 = vmul.f32 %v923, %v559
    %v926 = vadd.f32 %v920, %v924
    %v927 = vadd.f32 %v921, %v925
    %s928 = sld [smem:[#allocation10 + $0x26]]
    %v929 = vstv %s928
    %v930 = vmul.f32 %v929, %v621
    %v931 = vmul.f32 %v929, %v622
    %v932 = vadd.f32 %v926, %v930
    %v933 = vadd.f32 %v927, %v931
    %s934 = sld [smem:[#allocation10 + $0x27]]
    %v935 = vstv %s934
    %v936 = vmul.f32 %v935, %v684
    %v937 = vmul.f32 %v935, %v685
    %v938 = vadd.f32 %v932, %v936
    %v939 = vadd.f32 %v933, %v937
    %940 = vrot.lane.b32.xlu0 %v938, 126
    %v941 = vpop.permute.xlu0 %940
    %942 = vrot.lane.b32.xlu0 %v939, 126
    %v943 = vpop.permute.xlu0 %942
    %v944 = vsel %vm113, %v941, %v943
    %v945 = vsel %vm113, %v943, %v941
    %v946 = vadd.f32 %v892, %v944
    %v947 = vadd.f32 %v893, %v945
    %s948 = sld [smem:[#allocation2]]
    %v949 = vstv %s948
    %v950 = vadd.f32 %v946, %v949
    %v951 = vadd.f32 %v947, %v949
    %v952 = vmax.f32 %v950, 0.1
    %v953 = vmax.f32 %v951, 0.1
    %v954 = vmin.f32 %v952, 0.3
    %v955 = vmin.f32 %v953, 0.3
    %v956 = vmul.f32 %v954, %v954
    %v957 = vmul.f32 %v955, %v955
    %v958 = vand.u32 2147483647, %v132
    %v959 = vand.u32 2147483647, %v133
    %v960 = vmul.f32 %v956, %v958
    %v961 = vmul.f32 %v957, %v959
    %v962 = vmul.f32 %v960, %v132
    %v963 = vmul.f32 %v961, %v133
    %964 = vrot.lane.b32.xlu0 %v962, 127
    %v965 = vpop.permute.xlu0 %964
    %966 = vrot.lane.b32.xlu0 %v963, 127
    %v967 = vpop.permute.xlu0 %966
    %v968 = vsel %vm85, %v965, %v967
    %v969 = vsel %vm85, %v967, %v965
    %970 = vrot.lane.b32.xlu0 %v962, 1
    %v971 = vpop.permute.xlu0 %970
    %972 = vrot.lane.b32.xlu0 %v963, 1
    %v973 = vpop.permute.xlu0 %972
    %v974 = vsel %vm97, %v971, %v973
    %v975 = vsel %vm97, %v973, %v971
    %v976 = vsub.f32 %v968, %v975
    %v977 = vsub.f32 %v969, %v974
    %v978 = vmul.f32 %v976, 3.7712362
    %v979 = vmul.f32 %v977, 3.7712362
    %980 = vrot.lane.b32.xlu0 %v962, 126
    %v981 = vpop.permute.xlu0 %980
    %982 = vrot.lane.b32.xlu0 %v963, 126
    %v983 = vpop.permute.xlu0 %982
    %v984 = vsel %vm113, %v981, %v983
    %v985 = vsel %vm113, %v983, %v981
    %986 = vrot.lane.b32.xlu0 %v962, 2
    %v987 = vpop.permute.xlu0 %986
    %988 = vrot.lane.b32.xlu0 %v963, 2
    %v989 = vpop.permute.xlu0 %988
    %v990 = vsel %vm125, %v987, %v989
    %v991 = vsel %vm125, %v989, %v987
    %v992 = vsub.f32 %v984, %v991
    %v993 = vsub.f32 %v985, %v990
    %v994 = vmul.f32 %v992, -0.47140452
    %v995 = vmul.f32 %v993, -0.47140452
    %v996 = vadd.f32 %v978, %v994
    %v997 = vadd.f32 %v979, %v995
    %v1000 = vrot.slane %v997, 6
    %vm1001 = vcmask 1041408
    %v1002 = vsel %vm1001, %v996, %v1000
    %1004 = vst [vmem:[#allocation11] sm:$0xf] %v1002
    // Predicated region
    $region38: #{tpu_custom_call.1} parent=1 // pred_check
      _
    $region39: #{tpu_custom_call.1} parent=1 // pred_check_branch
      %1006 = sbr.rel (0) target = $region41
    $region40: #{tpu_custom_call.1} parent=1 // pred_region
      %1008 = vsyncadd [#allocation5], 0
      %s1010 = sshll.u32 [#allocation11], 4
      %s1011 = int_to_ptr.vmem [resolvable:$true] %s1010
      %s1012 = sshll.u32 %s5, 4
      %s1013 = int_to_ptr.hbm [resolvable:$true] %s1012
      %1015 = dma.vmem_to_hbm [thread:$0]  %s1011, 64, %s1013, [#allocation5]
    $region41: #{tpu_custom_call.1} parent=1 // pred_fallthru
      _
    // Predicated region
    $region42: #{tpu_custom_call.1} parent=1 // pred_check
      _
    $region43: #{tpu_custom_call.1} parent=1 // pred_check_branch
      %1017 = sbr.rel (0) target = $region45
    $region44: #{tpu_custom_call.1} parent=1 // pred_region
      %1019 = dma.done [#allocation5], 64
    $region45: #{tpu_custom_call.1} parent=1 // pred_fallthru
      _
    %1020 = vsyncpa [#allocation4], 1
    %1021 = vsyncpa [#allocation5], 1
    %1022 = vsyncpa [#allocation6], 1
    %1023 = vsyncpa [#allocation9], 1

</llo_original>
